<compile_context>
chip_gen: v6e
topology: v6e:2x2x1
jax: 0.10.0
libtpu: 0.0.40
codegen_flags: <defaults>
</compile_context>

<pallas_src>
import functools

import numpy as np
import jax
import jax.numpy as jnp
from jax import lax
from jax.experimental import pallas as pl
from jax.experimental.pallas import tpu as pltpu  # noqa: F401  (TPU backend)

# ----------------------------------------------------------------------------
# Model dimensions (small synthetic config, consistent with the module)
# ----------------------------------------------------------------------------
LATENT = 16                      # latent_dim
HIDDEN = 32                      # hidden_dim (module default 256; small here)
ADIM = 3                         # action_dim
TCP_POS, TGT_POS, DIST = 3, 3, 1
POSDIM = TCP_POS + TGT_POS + DIST            # 7
OUT_FEAT = 2 * LATENT + POSDIM               # 39
IMG, CIN = 16, 3                             # 16x16 RGB input images
C1, C2 = 8, 16                               # conv channels
OH1, OH2 = 7, 3                              # conv output sizes (k=3, s=2)
QPAD = 128                                   # lane-dense padded q output width
# TODO(synk): get_img_network()'s exact conv stack is not given in the prompt;
# a representative 2x(3x3, stride 2) conv + fc head producing `latent_dim`
# features is used (same assumption as the previous version).


# ----------------------------------------------------------------------------
# Fused forward kernel: conv1 -> conv2 -> cnn fc -> fc0/fc1/fc2/q head
# ----------------------------------------------------------------------------
def _relu(v):
    return jnp.maximum(v, 0.0)


def _elu(v):
    return jnp.where(v > 0, v, jnp.exp(v) - 1.0)


def fused_critic_kernel(
    xph_ref, pos_ref, act_ref,
    w1e_ref, b1c_ref, w2d_ref, b2c_ref, wf_ref, bfc_ref,
    w0a_ref, w0b_ref, b0_ref,
    w1a_ref, w1b_ref, b1h_ref,
    w2h_ref, b2h_ref,
    wq_ref, bq_ref,
    o_ref,
):
    def mm(a, w):
        # bf16 MXU matmul with f32 accumulation
        return jnp.dot(a.astype(w.dtype), w, preferred_element_type=jnp.float32)

    # ---- conv1 (3x3, stride 2): even / odd output rows from mod-4 phases ---
    # xph_ref[p][i'] holds image row 4*i' + p (both cameras + whole batch in lanes)
    y1e = (mm(xph_ref[0], w1e_ref[0]) + mm(xph_ref[1], w1e_ref[1])
           + mm(xph_ref[2], w1e_ref[2]))                       # (4, 2*B*7*C1)
    y1o = (mm(xph_ref[2, 0:3], w1e_ref[0]) + mm(xph_ref[3, 0:3], w1e_ref[1])
           + mm(xph_ref[0, 1:4], w1e_ref[2]))                  # (3, 2*B*7*C1)
    b1c = b1c_ref[...]
    y1e = _relu(y1e + b1c)
    y1o = _relu(y1o + b1c)

    # ---- conv2 (3x3, stride 2) ---------------------------------------------
    y2 = (mm(y1e[0:3], w2d_ref[0]) + mm(y1o, w2d_ref[1])
          + mm(y1e[1:4], w2d_ref[2]))                          # (3, 2*B*3*C2)
    y2 = _relu(y2 + b2c_ref[...])

    # ---- CNN fc -> per-sample latent features (b-major lanes) --------------
    feat = (mm(y2[0:1], wf_ref[0]) + mm(y2[1:2], wf_ref[1])
            + mm(y2[2:3], wf_ref[2]) + bfc_ref[...])           # (1, B*2*LATENT)

    # ---- critic head: torch.cat(...) realised as weight splits -------------
    h0 = _elu(mm(feat, w0a_ref[...]) + mm(pos_ref[...], w0b_ref[...]) + b0_ref[...])
    h1 = _elu(mm(h0, w1a_ref[...]) + mm(act_ref[...], w1b_ref[...]) + b1h_ref[...])
    h2 = _elu(mm(h1, w2h_ref[...]) + b2h_ref[...])
    o_ref[...] = mm(h2, wq_ref[...]) + bq_ref[...]             # (1, 128) lane-dense


# ----------------------------------------------------------------------------
# Logical (PyTorch-style) parameters
# ----------------------------------------------------------------------------
def _uniform(key, shape, bound):
    return jax.random.uniform(key, shape, jnp.float32, -bound, bound)


def init_logical_params(key):
    ks = iter(jax.random.split(key, 40))

    def cnn_params():
        f1, f2, f3 = CIN * 9, C1 * 9, C2 * OH2 * OH2
        return {
            "conv1_w": _uniform(next(ks), (3, 3, CIN, C1), 1 / np.sqrt(f1)),
            "conv1_b": _uniform(next(ks), (C1,), 1 / np.sqrt(f1)),
            "conv2_w": _uniform(next(ks), (3, 3, C1, C2), 1 / np.sqrt(f2)),
            "conv2_b": _uniform(next(ks), (C2,), 1 / np.sqrt(f2)),
            "fc_w": _uniform(next(ks), (f3, LATENT), 1 / np.sqrt(f3)),
            "fc_b": _uniform(next(ks), (LATENT,), 1 / np.sqrt(f3)),
        }

    head = {
        "w0": _uniform(next(ks), (OUT_FEAT, 32), 1 / np.sqrt(OUT_FEAT)),
        "b0": _uniform(next(ks), (32,), 1 / np.sqrt(OUT_FEAT)),
        "w1": _uniform(next(ks), (32 + ADIM, HIDDEN), 1 / np.sqrt(32 + ADIM)),
        "b1": _uniform(next(ks), (HIDDEN,), 1 / np.sqrt(32 + ADIM)),
        "w2": _uniform(next(ks), (HIDDEN, HIDDEN), 1 / np.sqrt(HIDDEN)),
        "b2": _uniform(next(ks), (HIDDEN,), 1 / np.sqrt(HIDDEN)),
        "wq": _uniform(next(ks), (HIDDEN, 1), 1 / np.sqrt(HIDDEN)),
        "bq": _uniform(next(ks), (1,), 1 / np.sqrt(HIDDEN)),
    }
    return {"cnn_static": cnn_params(), "cnn_gripper": cnn_params(), "head": head}


# ----------------------------------------------------------------------------
# Pack logical params into block-structured lane-packed weights (once, at init)
# ----------------------------------------------------------------------------
def pack_params(logical, B):
    f32 = np.float32
    cams = [logical["cnn_static"], logical["cnn_gripper"]]
    cnp = [{k: np.asarray(v, f32) for k, v in c.items()} for c in cams]
    h = {k: np.asarray(v, f32) for k, v in logical["head"].items()}

    LIN = 2 * B * IMG * CIN       # image-row lane width     (192 for B=2)
    L1 = 2 * B * OH1 * C1         # conv1-row lane width     (224)
    L2 = 2 * B * OH2 * C2         # conv2-row lane width     (192)
    L3 = B * 2 * LATENT           # cnn-feature lane width   (64), b-major

    def in_base(cam, b): return (cam * B + b) * IMG * CIN
    def c1_base(cam, b): return (cam * B + b) * OH1 * C1
    def c2_base(cam, b): return (cam * B + b) * OH2 * C2
    def f_base(b, cam):  return b * 2 * LATENT + cam * LATENT

    w1e = np.zeros((3, LIN, L1), f32)   # per H-offset di of conv1
    b1c = np.zeros((1, L1), f32)
    w2d = np.zeros((3, L1, L2), f32)    # per H-offset di of conv2
    b2c = np.zeros((1, L2), f32)
    wf = np.zeros((3, L2, L3), f32)     # per output row m of conv2
    bfc = np.zeros((1, L3), f32)

    for cam in range(2):
        c = cnp[cam]
        for b in range(B):
            ib, o1, o2 = in_base(cam, b), c1_base(cam, b), c2_base(cam, b)
            fb = f_base(b, cam)
            # conv1: column (W) offsets + input channels absorbed in the weight
            for j in range(OH1):
                b1c[0, o1 + j * C1:o1 + (j + 1) * C1] = c["conv1_b"]
                for di in range(3):
                    for dj in range(3):
                        w = 2 * j + dj
                        w1e[di, ib + w * CIN:ib + (w + 1) * CIN,
                            o1 + j * C1:o1 + (j + 1) * C1] = c["conv1_w"][di, dj]
            # conv2
            for n in range(OH2):
                b2c[0, o2 + n * C2:o2 + (n + 1) * C2] = c["conv2_b"]
                for di in range(3):
                    for dj in range(3):
                        w = 2 * n + dj
                        w2d[di, o1 + w * C1:o1 + (w + 1) * C1,
                            o2 + n * C2:o2 + (n + 1) * C2] = c["conv2_w"][di, dj]
            # cnn fc (flatten order = H, W, C; weights initialised consistently)
            # TODO(synk): PyTorch flattens NCHW as (C,H,W); permute rows of a
            # real checkpoint's fc weight before packing if loading torch weights.
            for m in range(3):
                for n in range(OH2):
                    rows = c["fc_w"][(m * OH2 + n) * C2:(m * OH2 + n + 1) * C2, :]
                    wf[m, o2 + n * C2:o2 + (n + 1) * C2, fb:fb + LATENT] = rows
            bfc[0, fb:fb + LATENT] = c["fc_b"]

    # ---- critic head: per-sample block-diagonal weights ---------------------
    w0a = np.zeros((L3, B * 32), f32)            # cnn-feature part of fc0
    w0b = np.zeros((B * POSDIM, B * 32), f32)    # pos/dist part of fc0
    b0 = np.tile(h["b0"][None, :], (1, B))
    w1a = np.zeros((B * 32, B * HIDDEN), f32)    # hidden part of fc1
    w1b = np.zeros((B * ADIM, B * HIDDEN), f32)  # action part of fc1 (the cat)
    b1h = np.tile(h["b1"][None, :], (1, B))
    w2h = np.zeros((B * HIDDEN, B * HIDDEN), f32)
    b2h = np.tile(h["b2"][None, :], (1, B))
    wq = np.zeros((B * HIDDEN, QPAD), f32)       # lane-dense padded q weights
    bq = np.zeros((1, QPAD), f32)
    for b in range(B):
        w0a[b * 32:(b + 1) * 32, b * 32:(b + 1) * 32] = h["w0"][:32]
        w0b[b * POSDIM:(b + 1) * POSDIM, b * 32:(b + 1) * 32] = h["w0"][32:]
        w1a[b * 32:(b + 1) * 32, b * HIDDEN:(b + 1) * HIDDEN] = h["w1"][:32]
        w1b[b * ADIM:(b + 1) * ADIM, b * HIDDEN:(b + 1) * HIDDEN] = h["w1"][32:]
        w2h[b * HIDDEN:(b + 1) * HIDDEN, b * HIDDEN:(b + 1) * HIDDEN] = h["w2"]
        wq[b * HIDDEN:(b + 1) * HIDDEN, b] = h["wq"][:, 0]
        bq[0, b] = h["bq"][0]

    bfp = jnp.bfloat16
    return {
        "w1e": jnp.asarray(w1e, bfp), "b1c": jnp.asarray(b1c),
        "w2d": jnp.asarray(w2d, bfp), "b2c": jnp.asarray(b2c),
        "wf": jnp.asarray(wf, bfp), "bfc": jnp.asarray(bfc),
        "w0a": jnp.asarray(w0a, bfp), "w0b": jnp.asarray(w0b, bfp),
        "b0": jnp.asarray(b0),
        "w1a": jnp.asarray(w1a, bfp), "w1b": jnp.asarray(w1b, bfp),
        "b1h": jnp.asarray(b1h),
        "w2h": jnp.asarray(w2h, bfp), "b2h": jnp.asarray(b2h),
        "wq": jnp.asarray(wq, bfp), "bq": jnp.asarray(bq),
    }


# ----------------------------------------------------------------------------
# Full forward: CNNCritic.forward(states, actions)
# ----------------------------------------------------------------------------
def cnn_critic_forward(packed, states, actions, B):
    # Layout plumbing only (tiny XLA transposes/reshapes, no data duplication).
    def lane_rows(img_nchw):                         # (B,3,16,16) -> (16, B*W*C)
        x = jnp.transpose(img_nchw, (2, 0, 3, 1))    # (H, B, W, C)
        return x.reshape(IMG, B * IMG * CIN)

    rows = jnp.concatenate([lane_rows(states["rgb_static"]),
                            lane_rows(states["rgb_gripper"])], axis=1)  # (16, 2*B*48)
    # mod-4 H-phase decomposition: xph[p, i'] = image row 4*i' + p
    xph = rows.reshape(4, 4, rows.shape[1]).transpose(1, 0, 2).astype(jnp.bfloat16)

    pos = jnp.concatenate([states["robot_obs"], states["detected_target_pos"],
                           states["target_distance"]], axis=-1)         # (B, 7)
    pos = pos.reshape(1, B * POSDIM).astype(jnp.float32)
    act = actions.reshape(1, B * ADIM).astype(jnp.float32)

    q_slab = pl.pallas_call(
        fused_critic_kernel,
        out_shape=jax.ShapeDtypeStruct((1, QPAD), jnp.float32),
        cost_estimate=pl.CostEstimate(flops=2_800_000, transcendentals=192,
                                      bytes_accessed=650_000),
    )(xph, pos, act,
      packed["w1e"], packed["b1c"], packed["w2d"], packed["b2c"],
      packed["wf"], packed["bfc"],
      packed["w0a"], packed["w0b"], packed["b0"],
      packed["w1a"], packed["w1b"], packed["b1h"],
      packed["w2h"], packed["b2h"],
      packed["wq"], packed["bq"])

    # torch .squeeze(): (B, 1) -> (B,) for B > 1.
    # NB: for B == 1 torch returns a 0-d scalar; here we keep shape (1,).
    return q_slab[0, :B]


# ----------------------------------------------------------------------------
# Pure-JAX reference (mixed-precision emulation of the kernel) for validation
# ----------------------------------------------------------------------------
def reference_forward(logical, states, actions):
    r = lambda x: x.astype(jnp.bfloat16).astype(jnp.float32)  # emulate bf16 MXU inputs

    def cnn(img, p):
        x = r(jnp.transpose(img, (0, 2, 3, 1)).astype(jnp.float32))
        for wk, bk in (("conv1_w", "conv1_b"), ("conv2_w", "conv2_b")):
            y = lax.conv_general_dilated(x, r(p[wk]), (2, 2), "VALID",
                                         dimension_numbers=("NHWC", "HWIO", "NHWC"))
            x = r(jnp.maximum(y + p[bk], 0.0))
        flat = x.reshape(x.shape[0], -1)                      # H,W,C flatten order
        return flat @ r(p["fc_w"]) + p["fc_b"]

    f_s = cnn(states["rgb_static"], logical["cnn_static"])
    f_g = cnn(states["rgb_gripper"], logical["cnn_gripper"])
    feats = jnp.concatenate([f_s, f_g, states["robot_obs"],
                             states["detected_target_pos"],
                             states["target_distance"]], axis=-1)
    h = logical["head"]
    elu = lambda v: jnp.where(v > 0, v, jnp.exp(v) - 1.0)
    x = elu(r(feats) @ r(h["w0"]) + h["b0"])
    x = r(jnp.concatenate([x, actions], axis=-1))
    x = elu(x @ r(h["w1"]) + h["b1"])
    x = elu(r(x) @ r(h["w2"]) + h["b2"])
    q = r(x) @ r(h["wq"]) + h["bq"]
    return q[:, 0]


if __name__ == "__main__":
    B = 2
    key = jax.random.PRNGKey(0)
    pkey, k1, k2, k3, k4, k5, k6 = jax.random.split(key, 7)

    logical = init_logical_params(pkey)
    packed = pack_params(logical, B)

    states = {
        "rgb_static": jax.random.normal(k1, (B, CIN, IMG, IMG), jnp.float32),
        "rgb_gripper": jax.random.normal(k2, (B, CIN, IMG, IMG), jnp.float32),
        "robot_obs": jax.random.normal(k3, (B, TCP_POS), jnp.float32),
        "detected_target_pos": jax.random.normal(k4, (B, TGT_POS), jnp.float32),
        "target_distance": jax.random.normal(k5, (B, DIST), jnp.float32),
    }
    actions = jax.random.normal(k6, (B, ADIM), jnp.float32)

    forward = jax.jit(functools.partial(cnn_critic_forward, B=B))
    q = jax.block_until_ready(forward(packed, states, actions))
    assert q.shape == (B,), q.shape
    assert bool(jnp.all(jnp.isfinite(q)))

    q_ref = jax.block_until_ready(reference_forward(logical, states, actions))
    np.testing.assert_allclose(np.asarray(q), np.asarray(q_ref), rtol=1e-2, atol=1e-2)

    print("KERNEL_OK")
</pallas_src>

<mosaic_0001>
module attributes {stable_mosaic.version = 11 : i64} {
  func.func @fused_critic_kernel(%arg0: memref<4x4x192xbf16, #tpu.memory_space<vmem>>, %arg1: memref<1x14xf32, #tpu.memory_space<vmem>>, %arg2: memref<1x6xf32, #tpu.memory_space<vmem>>, %arg3: memref<3x192x224xbf16, #tpu.memory_space<vmem>>, %arg4: memref<1x224xf32, #tpu.memory_space<vmem>>, %arg5: memref<3x224x192xbf16, #tpu.memory_space<vmem>>, %arg6: memref<1x192xf32, #tpu.memory_space<vmem>>, %arg7: memref<3x192x64xbf16, #tpu.memory_space<vmem>>, %arg8: memref<1x64xf32, #tpu.memory_space<vmem>>, %arg9: memref<64x64xbf16, #tpu.memory_space<vmem>>, %arg10: memref<14x64xbf16, #tpu.memory_space<vmem>>, %arg11: memref<1x64xf32, #tpu.memory_space<vmem>>, %arg12: memref<64x64xbf16, #tpu.memory_space<vmem>>, %arg13: memref<6x64xbf16, #tpu.memory_space<vmem>>, %arg14: memref<1x64xf32, #tpu.memory_space<vmem>>, %arg15: memref<64x64xbf16, #tpu.memory_space<vmem>>, %arg16: memref<1x64xf32, #tpu.memory_space<vmem>>, %arg17: memref<64x128xbf16, #tpu.memory_space<vmem>>, %arg18: memref<1x128xf32, #tpu.memory_space<vmem>>, %arg19: memref<1x128xf32, #tpu.memory_space<vmem>>) attributes {dimension_semantics = [], scalar_prefetch = 0 : i64, scratch_operands = 0 : i64, tpu.core_type = #tpu.core_type<tc>} {
    %c0 = arith.constant 0 : index
    %c0_0 = arith.constant 0 : index
    %c0_1 = arith.constant 0 : index
    %0 = vector.load %arg0[%c0, %c0_0, %c0_1] : memref<4x4x192xbf16, #tpu.memory_space<vmem>>, vector<1x4x192xbf16>
    %1 = vector.shape_cast %0 : vector<1x4x192xbf16> to vector<4x192xbf16>
    %c0_2 = arith.constant 0 : index
    %c0_3 = arith.constant 0 : index
    %c0_4 = arith.constant 0 : index
    %2 = vector.load %arg3[%c0_2, %c0_3, %c0_4] : memref<3x192x224xbf16, #tpu.memory_space<vmem>>, vector<1x192x224xbf16>
    %3 = vector.shape_cast %2 : vector<1x192x224xbf16> to vector<192x224xbf16>
    %cst = arith.constant dense<0.000000e+00> : vector<4x224xf32>
    %4 = tpu.matmul %1, %3, %cst {dimension_numbers = #tpu.dot_dimension_numbers<[1], [0], [0], [1], [0, 0, 1, 1], [], []>} : vector<4x192xbf16>, vector<192x224xbf16>, vector<4x224xf32> -> vector<4x224xf32>
    %c1 = arith.constant 1 : index
    %c0_5 = arith.constant 0 : index
    %c0_6 = arith.constant 0 : index
    %5 = vector.load %arg0[%c1, %c0_5, %c0_6] : memref<4x4x192xbf16, #tpu.memory_space<vmem>>, vector<1x4x192xbf16>
    %6 = vector.shape_cast %5 : vector<1x4x192xbf16> to vector<4x192xbf16>
    %c1_7 = arith.constant 1 : index
    %c0_8 = arith.constant 0 : index
    %c0_9 = arith.constant 0 : index
    %7 = vector.load %arg3[%c1_7, %c0_8, %c0_9] : memref<3x192x224xbf16, #tpu.memory_space<vmem>>, vector<1x192x224xbf16>
    %8 = vector.shape_cast %7 : vector<1x192x224xbf16> to vector<192x224xbf16>
    %cst_10 = arith.constant dense<0.000000e+00> : vector<4x224xf32>
    %9 = tpu.matmul %6, %8, %cst_10 {dimension_numbers = #tpu.dot_dimension_numbers<[1], [0], [0], [1], [0, 0, 1, 1], [], []>} : vector<4x192xbf16>, vector<192x224xbf16>, vector<4x224xf32> -> vector<4x224xf32>
    %10 = arith.addf %4, %9 : vector<4x224xf32>
    %c2 = arith.constant 2 : index
    %c0_11 = arith.constant 0 : index
    %c0_12 = arith.constant 0 : index
    %11 = vector.load %arg0[%c2, %c0_11, %c0_12] : memref<4x4x192xbf16, #tpu.memory_space<vmem>>, vector<1x4x192xbf16>
    %12 = vector.shape_cast %11 : vector<1x4x192xbf16> to vector<4x192xbf16>
    %c2_13 = arith.constant 2 : index
    %c0_14 = arith.constant 0 : index
    %c0_15 = arith.constant 0 : index
    %13 = vector.load %arg3[%c2_13, %c0_14, %c0_15] : memref<3x192x224xbf16, #tpu.memory_space<vmem>>, vector<1x192x224xbf16>
    %14 = vector.shape_cast %13 : vector<1x192x224xbf16> to vector<192x224xbf16>
    %cst_16 = arith.constant dense<0.000000e+00> : vector<4x224xf32>
    %15 = tpu.matmul %12, %14, %cst_16 {dimension_numbers = #tpu.dot_dimension_numbers<[1], [0], [0], [1], [0, 0, 1, 1], [], []>} : vector<4x192xbf16>, vector<192x224xbf16>, vector<4x224xf32> -> vector<4x224xf32>
    %16 = arith.addf %10, %15 : vector<4x224xf32>
    %c2_17 = arith.constant 2 : index
    %c0_18 = arith.constant 0 : index
    %c0_19 = arith.constant 0 : index
    %17 = vector.load %arg0[%c2_17, %c0_18, %c0_19] : memref<4x4x192xbf16, #tpu.memory_space<vmem>>, vector<1x3x192xbf16>
    %18 = vector.shape_cast %17 : vector<1x3x192xbf16> to vector<3x192xbf16>
    %c0_20 = arith.constant 0 : index
    %c0_21 = arith.constant 0 : index
    %c0_22 = arith.constant 0 : index
    %19 = vector.load %arg3[%c0_20, %c0_21, %c0_22] : memref<3x192x224xbf16, #tpu.memory_space<vmem>>, vector<1x192x224xbf16>
    %20 = vector.shape_cast %19 : vector<1x192x224xbf16> to vector<192x224xbf16>
    %cst_23 = arith.constant dense<0.000000e+00> : vector<3x224xf32>
    %21 = tpu.matmul %18, %20, %cst_23 {dimension_numbers = #tpu.dot_dimension_numbers<[1], [0], [0], [1], [0, 0, 1, 1], [], []>} : vector<3x192xbf16>, vector<192x224xbf16>, vector<3x224xf32> -> vector<3x224xf32>
    %c3 = arith.constant 3 : index
    %c0_24 = arith.constant 0 : index
    %c0_25 = arith.constant 0 : index
    %22 = vector.load %arg0[%c3, %c0_24, %c0_25] : memref<4x4x192xbf16, #tpu.memory_space<vmem>>, vector<1x3x192xbf16>
    %23 = vector.shape_cast %22 : vector<1x3x192xbf16> to vector<3x192xbf16>
    %c1_26 = arith.constant 1 : index
    %c0_27 = arith.constant 0 : index
    %c0_28 = arith.constant 0 : index
    %24 = vector.load %arg3[%c1_26, %c0_27, %c0_28] : memref<3x192x224xbf16, #tpu.memory_space<vmem>>, vector<1x192x224xbf16>
    %25 = vector.shape_cast %24 : vector<1x192x224xbf16> to vector<192x224xbf16>
    %cst_29 = arith.constant dense<0.000000e+00> : vector<3x224xf32>
    %26 = tpu.matmul %23, %25, %cst_29 {dimension_numbers = #tpu.dot_dimension_numbers<[1], [0], [0], [1], [0, 0, 1, 1], [], []>} : vector<3x192xbf16>, vector<192x224xbf16>, vector<3x224xf32> -> vector<3x224xf32>
    %27 = arith.addf %21, %26 : vector<3x224xf32>
    %c0_30 = arith.constant 0 : index
    %c1_31 = arith.constant 1 : index
    %c0_32 = arith.constant 0 : index
    %28 = vector.load %arg0[%c0_30, %c1_31, %c0_32] : memref<4x4x192xbf16, #tpu.memory_space<vmem>>, vector<1x3x192xbf16>
    %29 = vector.shape_cast %28 : vector<1x3x192xbf16> to vector<3x192xbf16>
    %c2_33 = arith.constant 2 : index
    %c0_34 = arith.constant 0 : index
    %c0_35 = arith.constant 0 : index
    %30 = vector.load %arg3[%c2_33, %c0_34, %c0_35] : memref<3x192x224xbf16, #tpu.memory_space<vmem>>, vector<1x192x224xbf16>
    %31 = vector.shape_cast %30 : vector<1x192x224xbf16> to vector<192x224xbf16>
    %cst_36 = arith.constant dense<0.000000e+00> : vector<3x224xf32>
    %32 = tpu.matmul %29, %31, %cst_36 {dimension_numbers = #tpu.dot_dimension_numbers<[1], [0], [0], [1], [0, 0, 1, 1], [], []>} : vector<3x192xbf16>, vector<192x224xbf16>, vector<3x224xf32> -> vector<3x224xf32>
    %33 = arith.addf %27, %32 : vector<3x224xf32>
    %c0_37 = arith.constant 0 : index
    %c0_38 = arith.constant 0 : index
    %34 = vector.load %arg4[%c0_37, %c0_38] : memref<1x224xf32, #tpu.memory_space<vmem>>, vector<1x224xf32>
    %35 = vector.broadcast %34 : vector<1x224xf32> to vector<4x224xf32>
    %36 = arith.addf %16, %35 : vector<4x224xf32>
    %cst_39 = arith.constant 0.000000e+00 : f32
    %37 = vector.broadcast %cst_39 : f32 to vector<4x224xf32>
    %38 = arith.maximumf %36, %37 : vector<4x224xf32>
    %39 = vector.broadcast %34 : vector<1x224xf32> to vector<3x224xf32>
    %40 = arith.addf %33, %39 : vector<3x224xf32>
    %cst_40 = arith.constant 0.000000e+00 : f32
    %41 = vector.broadcast %cst_40 : f32 to vector<3x224xf32>
    %42 = arith.maximumf %40, %41 : vector<3x224xf32>
    %43 = vector.extract_strided_slice %38 {offsets = [0, 0], sizes = [3, 224], strides = [1, 1]} : vector<4x224xf32> to vector<3x224xf32>
    %c0_41 = arith.constant 0 : index
    %c0_42 = arith.constant 0 : index
    %c0_43 = arith.constant 0 : index
    %44 = vector.load %arg5[%c0_41, %c0_42, %c0_43] : memref<3x224x192xbf16, #tpu.memory_space<vmem>>, vector<1x224x192xbf16>
    %45 = vector.shape_cast %44 : vector<1x224x192xbf16> to vector<224x192xbf16>
    %46 = arith.truncf %43 : vector<3x224xf32> to vector<3x224xbf16>
    %cst_44 = arith.constant dense<0.000000e+00> : vector<3x192xf32>
    %47 = tpu.matmul %46, %45, %cst_44 {dimension_numbers = #tpu.dot_dimension_numbers<[1], [0], [0], [1], [0, 0, 1, 1], [], []>} : vector<3x224xbf16>, vector<224x192xbf16>, vector<3x192xf32> -> vector<3x192xf32>
    %c1_45 = arith.constant 1 : index
    %c0_46 = arith.constant 0 : index
    %c0_47 = arith.constant 0 : index
    %48 = vector.load %arg5[%c1_45, %c0_46, %c0_47] : memref<3x224x192xbf16, #tpu.memory_space<vmem>>, vector<1x224x192xbf16>
    %49 = vector.shape_cast %48 : vector<1x224x192xbf16> to vector<224x192xbf16>
    %50 = arith.truncf %42 : vector<3x224xf32> to vector<3x224xbf16>
    %cst_48 = arith.constant dense<0.000000e+00> : vector<3x192xf32>
    %51 = tpu.matmul %50, %49, %cst_48 {dimension_numbers = #tpu.dot_dimension_numbers<[1], [0], [0], [1], [0, 0, 1, 1], [], []>} : vector<3x224xbf16>, vector<224x192xbf16>, vector<3x192xf32> -> vector<3x192xf32>
    %52 = arith.addf %47, %51 : vector<3x192xf32>
    %53 = vector.extract_strided_slice %38 {offsets = [1, 0], sizes = [3, 224], strides = [1, 1]} : vector<4x224xf32> to vector<3x224xf32>
    %c2_49 = arith.constant 2 : index
    %c0_50 = arith.constant 0 : index
    %c0_51 = arith.constant 0 : index
    %54 = vector.load %arg5[%c2_49, %c0_50, %c0_51] : memref<3x224x192xbf16, #tpu.memory_space<vmem>>, vector<1x224x192xbf16>
    %55 = vector.shape_cast %54 : vector<1x224x192xbf16> to vector<224x192xbf16>
    %56 = arith.truncf %53 : vector<3x224xf32> to vector<3x224xbf16>
    %cst_52 = arith.constant dense<0.000000e+00> : vector<3x192xf32>
    %57 = tpu.matmul %56, %55, %cst_52 {dimension_numbers = #tpu.dot_dimension_numbers<[1], [0], [0], [1], [0, 0, 1, 1], [], []>} : vector<3x224xbf16>, vector<224x192xbf16>, vector<3x192xf32> -> vector<3x192xf32>
    %58 = arith.addf %52, %57 : vector<3x192xf32>
    %c0_53 = arith.constant 0 : index
    %c0_54 = arith.constant 0 : index
    %59 = vector.load %arg6[%c0_53, %c0_54] : memref<1x192xf32, #tpu.memory_space<vmem>>, vector<1x192xf32>
    %60 = vector.broadcast %59 : vector<1x192xf32> to vector<3x192xf32>
    %61 = arith.addf %58, %60 : vector<3x192xf32>
    %cst_55 = arith.constant 0.000000e+00 : f32
    %62 = vector.broadcast %cst_55 : f32 to vector<3x192xf32>
    %63 = arith.maximumf %61, %62 : vector<3x192xf32>
    %64 = vector.extract_strided_slice %63 {offsets = [0, 0], sizes = [1, 192], strides = [1, 1]} : vector<3x192xf32> to vector<1x192xf32>
    %c0_56 = arith.constant 0 : index
    %c0_57 = arith.constant 0 : index
    %c0_58 = arith.constant 0 : index
    %65 = vector.load %arg7[%c0_56, %c0_57, %c0_58] : memref<3x192x64xbf16, #tpu.memory_space<vmem>>, vector<1x192x64xbf16>
    %66 = vector.shape_cast %65 : vector<1x192x64xbf16> to vector<192x64xbf16>
    %67 = arith.truncf %64 : vector<1x192xf32> to vector<1x192xbf16>
    %cst_59 = arith.constant dense<0.000000e+00> : vector<1x64xf32>
    %68 = tpu.matmul %67, %66, %cst_59 {dimension_numbers = #tpu.dot_dimension_numbers<[1], [0], [0], [1], [0, 0, 1, 1], [], []>} : vector<1x192xbf16>, vector<192x64xbf16>, vector<1x64xf32> -> vector<1x64xf32>
    %69 = vector.extract_strided_slice %63 {offsets = [1, 0], sizes = [1, 192], strides = [1, 1]} : vector<3x192xf32> to vector<1x192xf32>
    %c1_60 = arith.constant 1 : index
    %c0_61 = arith.constant 0 : index
    %c0_62 = arith.constant 0 : index
    %70 = vector.load %arg7[%c1_60, %c0_61, %c0_62] : memref<3x192x64xbf16, #tpu.memory_space<vmem>>, vector<1x192x64xbf16>
    %71 = vector.shape_cast %70 : vector<1x192x64xbf16> to vector<192x64xbf16>
    %72 = arith.truncf %69 : vector<1x192xf32> to vector<1x192xbf16>
    %cst_63 = arith.constant dense<0.000000e+00> : vector<1x64xf32>
    %73 = tpu.matmul %72, %71, %cst_63 {dimension_numbers = #tpu.dot_dimension_numbers<[1], [0], [0], [1], [0, 0, 1, 1], [], []>} : vector<1x192xbf16>, vector<192x64xbf16>, vector<1x64xf32> -> vector<1x64xf32>
    %74 = arith.addf %68, %73 : vector<1x64xf32>
    %75 = vector.extract_strided_slice %63 {offsets = [2, 0], sizes = [1, 192], strides = [1, 1]} : vector<3x192xf32> to vector<1x192xf32>
    %c2_64 = arith.constant 2 : index
    %c0_65 = arith.constant 0 : index
    %c0_66 = arith.constant 0 : index
    %76 = vector.load %arg7[%c2_64, %c0_65, %c0_66] : memref<3x192x64xbf16, #tpu.memory_space<vmem>>, vector<1x192x64xbf16>
    %77 = vector.shape_cast %76 : vector<1x192x64xbf16> to vector<192x64xbf16>
    %78 = arith.truncf %75 : vector<1x192xf32> to vector<1x192xbf16>
    %cst_67 = arith.constant dense<0.000000e+00> : vector<1x64xf32>
    %79 = tpu.matmul %78, %77, %cst_67 {dimension_numbers = #tpu.dot_dimension_numbers<[1], [0], [0], [1], [0, 0, 1, 1], [], []>} : vector<1x192xbf16>, vector<192x64xbf16>, vector<1x64xf32> -> vector<1x64xf32>
    %80 = arith.addf %74, %79 : vector<1x64xf32>
    %c0_68 = arith.constant 0 : index
    %c0_69 = arith.constant 0 : index
    %81 = vector.load %arg8[%c0_68, %c0_69] : memref<1x64xf32, #tpu.memory_space<vmem>>, vector<1x64xf32>
    %82 = arith.addf %80, %81 : vector<1x64xf32>
    %c0_70 = arith.constant 0 : index
    %c0_71 = arith.constant 0 : index
    %83 = vector.load %arg9[%c0_70, %c0_71] : memref<64x64xbf16, #tpu.memory_space<vmem>>, vector<64x64xbf16>
    %84 = arith.truncf %82 : vector<1x64xf32> to vector<1x64xbf16>
    %cst_72 = arith.constant dense<0.000000e+00> : vector<1x64xf32>
    %85 = tpu.matmul %84, %83, %cst_72 {dimension_numbers = #tpu.dot_dimension_numbers<[1], [0], [0], [1], [0, 0, 1, 1], [], []>} : vector<1x64xbf16>, vector<64x64xbf16>, vector<1x64xf32> -> vector<1x64xf32>
    %c0_73 = arith.constant 0 : index
    %c0_74 = arith.constant 0 : index
    %86 = vector.load %arg1[%c0_73, %c0_74] : memref<1x14xf32, #tpu.memory_space<vmem>>, vector<1x14xf32>
    %c0_75 = arith.constant 0 : index
    %c0_76 = arith.constant 0 : index
    %87 = vector.load %arg10[%c0_75, %c0_76] : memref<14x64xbf16, #tpu.memory_space<vmem>>, vector<14x64xbf16>
    %88 = arith.truncf %86 : vector<1x14xf32> to vector<1x14xbf16>
    %cst_77 = arith.constant dense<0.000000e+00> : vector<1x64xf32>
    %89 = tpu.matmul %88, %87, %cst_77 {dimension_numbers = #tpu.dot_dimension_numbers<[1], [0], [0], [1], [0, 0, 1, 1], [], []>} : vector<1x14xbf16>, vector<14x64xbf16>, vector<1x64xf32> -> vector<1x64xf32>
    %90 = arith.addf %85, %89 : vector<1x64xf32>
    %c0_78 = arith.constant 0 : index
    %c0_79 = arith.constant 0 : index
    %91 = vector.load %arg11[%c0_78, %c0_79] : memref<1x64xf32, #tpu.memory_space<vmem>>, vector<1x64xf32>
    %92 = arith.addf %90, %91 : vector<1x64xf32>
    %cst_80 = arith.constant 0.000000e+00 : f32
    %93 = vector.broadcast %cst_80 : f32 to vector<1x64xf32>
    %94 = arith.cmpf ogt, %92, %93 : vector<1x64xf32>
    %95 = math.exp %92 : vector<1x64xf32>
    %cst_81 = arith.constant 1.000000e+00 : f32
    %96 = vector.broadcast %cst_81 : f32 to vector<1x64xf32>
    %97 = arith.subf %95, %96 : vector<1x64xf32>
    %98 = arith.select %94, %92, %97 : vector<1x64xi1>, vector<1x64xf32>
    %c0_82 = arith.constant 0 : index
    %c0_83 = arith.constant 0 : index
    %99 = vector.load %arg12[%c0_82, %c0_83] : memref<64x64xbf16, #tpu.memory_space<vmem>>, vector<64x64xbf16>
    %100 = arith.truncf %98 : vector<1x64xf32> to vector<1x64xbf16>
    %cst_84 = arith.constant dense<0.000000e+00> : vector<1x64xf32>
    %101 = tpu.matmul %100, %99, %cst_84 {dimension_numbers = #tpu.dot_dimension_numbers<[1], [0], [0], [1], [0, 0, 1, 1], [], []>} : vector<1x64xbf16>, vector<64x64xbf16>, vector<1x64xf32> -> vector<1x64xf32>
    %c0_85 = arith.constant 0 : index
    %c0_86 = arith.constant 0 : index
    %102 = vector.load %arg2[%c0_85, %c0_86] : memref<1x6xf32, #tpu.memory_space<vmem>>, vector<1x6xf32>
    %c0_87 = arith.constant 0 : index
    %c0_88 = arith.constant 0 : index
    %103 = vector.load %arg13[%c0_87, %c0_88] : memref<6x64xbf16, #tpu.memory_space<vmem>>, vector<6x64xbf16>
    %104 = arith.truncf %102 : vector<1x6xf32> to vector<1x6xbf16>
    %cst_89 = arith.constant dense<0.000000e+00> : vector<1x64xf32>
    %105 = tpu.matmul %104, %103, %cst_89 {dimension_numbers = #tpu.dot_dimension_numbers<[1], [0], [0], [1], [0, 0, 1, 1], [], []>} : vector<1x6xbf16>, vector<6x64xbf16>, vector<1x64xf32> -> vector<1x64xf32>
    %106 = arith.addf %101, %105 : vector<1x64xf32>
    %c0_90 = arith.constant 0 : index
    %c0_91 = arith.constant 0 : index
    %107 = vector.load %arg14[%c0_90, %c0_91] : memref<1x64xf32, #tpu.memory_space<vmem>>, vector<1x64xf32>
    %108 = arith.addf %106, %107 : vector<1x64xf32>
    %cst_92 = arith.constant 0.000000e+00 : f32
    %109 = vector.broadcast %cst_92 : f32 to vector<1x64xf32>
    %110 = arith.cmpf ogt, %108, %109 : vector<1x64xf32>
    %111 = math.exp %108 : vector<1x64xf32>
    %cst_93 = arith.constant 1.000000e+00 : f32
    %112 = vector.broadcast %cst_93 : f32 to vector<1x64xf32>
    %113 = arith.subf %111, %112 : vector<1x64xf32>
    %114 = arith.select %110, %108, %113 : vector<1x64xi1>, vector<1x64xf32>
    %c0_94 = arith.constant 0 : index
    %c0_95 = arith.constant 0 : index
    %115 = vector.load %arg15[%c0_94, %c0_95] : memref<64x64xbf16, #tpu.memory_space<vmem>>, vector<64x64xbf16>
    %116 = arith.truncf %114 : vector<1x64xf32> to vector<1x64xbf16>
    %cst_96 = arith.constant dense<0.000000e+00> : vector<1x64xf32>
    %117 = tpu.matmul %116, %115, %cst_96 {dimension_numbers = #tpu.dot_dimension_numbers<[1], [0], [0], [1], [0, 0, 1, 1], [], []>} : vector<1x64xbf16>, vector<64x64xbf16>, vector<1x64xf32> -> vector<1x64xf32>
    %c0_97 = arith.constant 0 : index
    %c0_98 = arith.constant 0 : index
    %118 = vector.load %arg16[%c0_97, %c0_98] : memref<1x64xf32, #tpu.memory_space<vmem>>, vector<1x64xf32>
    %119 = arith.addf %117, %118 : vector<1x64xf32>
    %cst_99 = arith.constant 0.000000e+00 : f32
    %120 = vector.broadcast %cst_99 : f32 to vector<1x64xf32>
    %121 = arith.cmpf ogt, %119, %120 : vector<1x64xf32>
    %122 = math.exp %119 : vector<1x64xf32>
    %cst_100 = arith.constant 1.000000e+00 : f32
    %123 = vector.broadcast %cst_100 : f32 to vector<1x64xf32>
    %124 = arith.subf %122, %123 : vector<1x64xf32>
    %125 = arith.select %121, %119, %124 : vector<1x64xi1>, vector<1x64xf32>
    %c0_101 = arith.constant 0 : index
    %c0_102 = arith.constant 0 : index
    %126 = vector.load %arg17[%c0_101, %c0_102] : memref<64x128xbf16, #tpu.memory_space<vmem>>, vector<64x128xbf16>
    %127 = arith.truncf %125 : vector<1x64xf32> to vector<1x64xbf16>
    %cst_103 = arith.constant dense<0.000000e+00> : vector<1x128xf32>
    %128 = tpu.matmul %127, %126, %cst_103 {dimension_numbers = #tpu.dot_dimension_numbers<[1], [0], [0], [1], [0, 0, 1, 1], [], []>} : vector<1x64xbf16>, vector<64x128xbf16>, vector<1x128xf32> -> vector<1x128xf32>
    %c0_104 = arith.constant 0 : index
    %c0_105 = arith.constant 0 : index
    %129 = vector.load %arg18[%c0_104, %c0_105] : memref<1x128xf32, #tpu.memory_space<vmem>>, vector<1x128xf32>
    %130 = arith.addf %128, %129 : vector<1x128xf32>
    %c0_106 = arith.constant 0 : index
    %c0_107 = arith.constant 0 : index
    %131 = vector.load %arg19[%c0_106, %c0_107] : memref<1x128xf32, #tpu.memory_space<vmem>>, vector<1x128xf32>
    tpu.vector_store %arg19[%c0_106, %c0_107], %130 {strides = array<i32>} : memref<1x128xf32, #tpu.memory_space<vmem>>, vector<1x128xf32>,
    return
  }
}

</mosaic_0001>

<llo_original>
// kernel: cnn_critic_forward.1
$region0: #{cnn_critic_forward.1}
  #allocation0 [shape = 'u32[]', space=smem, size = 0x4, offset = 0x4, fixed_abs, tag = 'smem constant byte address 0x4 - core index']
  #allocation1 [shape = 'u32[144,128]{1,0:T(1,128)}', space=vmem, size = 0x12000, scoped, tag = 'internal scratch']
  %s0 = inlined_call_operand.vmem [shape: bf16[4,4,192], index: 0, kind: input, shape index: {}]
  %s1 = inlined_call_operand.vmem [shape: f32[1,14], index: 1, kind: input, shape index: {}]
  %s2 = inlined_call_operand.vmem [shape: f32[1,6], index: 2, kind: input, shape index: {}]
  %s3 = inlined_call_operand.vmem [shape: bf16[3,192,224], index: 3, kind: input, shape index: {}]
  %s4 = inlined_call_operand.vmem [shape: f32[1,224], index: 4, kind: input, shape index: {}]
  %s5 = inlined_call_operand.vmem [shape: bf16[3,224,192], index: 5, kind: input, shape index: {}]
  %s6 = inlined_call_operand.vmem [shape: f32[1,192], index: 6, kind: input, shape index: {}]
  %s7 = inlined_call_operand.vmem [shape: bf16[3,192,64], index: 7, kind: input, shape index: {}]
  %s8 = inlined_call_operand.vmem [shape: f32[1,64], index: 8, kind: input, shape index: {}]
  %s9 = inlined_call_operand.vmem [shape: bf16[64,64], index: 9, kind: input, shape index: {}]
  %s10 = inlined_call_operand.vmem [shape: bf16[14,64], index: 10, kind: input, shape index: {}]
  %s11 = inlined_call_operand.vmem [shape: f32[1,64], index: 11, kind: input, shape index: {}]
  %s12 = inlined_call_operand.vmem [shape: bf16[64,64], index: 12, kind: input, shape index: {}]
  %s13 = inlined_call_operand.vmem [shape: bf16[6,64], index: 13, kind: input, shape index: {}]
  %s14 = inlined_call_operand.vmem [shape: f32[1,64], index: 14, kind: input, shape index: {}]
  %s15 = inlined_call_operand.vmem [shape: bf16[64,64], index: 15, kind: input, shape index: {}]
  %s16 = inlined_call_operand.vmem [shape: f32[1,64], index: 16, kind: input, shape index: {}]
  %s17 = inlined_call_operand.vmem [shape: bf16[64,128], index: 17, kind: input, shape index: {}]
  %s18 = inlined_call_operand.vmem [shape: f32[1,128], index: 18, kind: input, shape index: {}]
  %s19 = inlined_call_operand.vmem [shape: f32[1,128], index: 19, kind: output, shape index: {}]
  %s20 = sld [smem:[#allocation0]]
  $region86: #{cnn_critic_forward.1} parent=0
    _
  %s22 = ssub.s32 1, %s20
  %s23 = scalar_select 0, %s22, %s20
  // Predicated region
  $region2: #{cnn_critic_forward.1} parent=0 // pred_check
    _
  $region3: #{cnn_critic_forward.1} parent=0 // pred_check_branch
    %25 = sbr.rel (0) target = $region5
  $region4: #{cnn_critic_forward.1} parent=0 // pred_region
    _
  $region5: #{cnn_critic_forward.1} parent=0 // pred_fallthru
    _
  // Predicated region
  $region6: #{cnn_critic_forward.1} parent=0 // pred_check
    _
  $region7: #{cnn_critic_forward.1} parent=0 // pred_check_branch
    %27 = sbr.rel (0) target = $region9
  $region8: #{cnn_critic_forward.1} parent=0 // pred_region
    _
  $region9: #{cnn_critic_forward.1} parent=0 // pred_fallthru
    _
  // Predicated region
  $region10: #{cnn_critic_forward.1} parent=0 // pred_check
    _
  $region11: #{cnn_critic_forward.1} parent=0 // pred_check_branch
    %29 = sbr.rel (0) target = $region13
  $region12: #{cnn_critic_forward.1} parent=0 // pred_region
    _
  $region13: #{cnn_critic_forward.1} parent=0 // pred_fallthru
    _
  // Predicated region
  $region14: #{cnn_critic_forward.1} parent=0 // pred_check
    _
  $region15: #{cnn_critic_forward.1} parent=0 // pred_check_branch
    %31 = sbr.rel (0) target = $region17
  $region16: #{cnn_critic_forward.1} parent=0 // pred_region
    _
  $region17: #{cnn_critic_forward.1} parent=0 // pred_fallthru
    _
  // Predicated region
  $region18: #{cnn_critic_forward.1} parent=0 // pred_check
    _
  $region19: #{cnn_critic_forward.1} parent=0 // pred_check_branch
    %33 = sbr.rel (0) target = $region21
  $region20: #{cnn_critic_forward.1} parent=0 // pred_region
    _
  $region21: #{cnn_critic_forward.1} parent=0 // pred_fallthru
    _
  // Predicated region
  $region22: #{cnn_critic_forward.1} parent=0 // pred_check
    _
  $region23: #{cnn_critic_forward.1} parent=0 // pred_check_branch
    %35 = sbr.rel (0) target = $region25
  $region24: #{cnn_critic_forward.1} parent=0 // pred_region
    _
  $region25: #{cnn_critic_forward.1} parent=0 // pred_fallthru
    _
  // Predicated region
  $region26: #{cnn_critic_forward.1} parent=0 // pred_check
    _
  $region27: #{cnn_critic_forward.1} parent=0 // pred_check_branch
    %37 = sbr.rel (0) target = $region29
  $region28: #{cnn_critic_forward.1} parent=0 // pred_region
    _
  $region29: #{cnn_critic_forward.1} parent=0 // pred_fallthru
    _
  // Predicated region
  $region30: #{cnn_critic_forward.1} parent=0 // pred_check
    _
  $region31: #{cnn_critic_forward.1} parent=0 // pred_check_branch
    %39 = sbr.rel (0) target = $region33
  $region32: #{cnn_critic_forward.1} parent=0 // pred_region
    _
  $region33: #{cnn_critic_forward.1} parent=0 // pred_fallthru
    _
  // Predicated region
  $region34: #{cnn_critic_forward.1} parent=0 // pred_check
    _
  $region35: #{cnn_critic_forward.1} parent=0 // pred_check_branch
    %41 = sbr.rel (0) target = $region37
  $region36: #{cnn_critic_forward.1} parent=0 // pred_region
    _
  $region37: #{cnn_critic_forward.1} parent=0 // pred_fallthru
    _
  // Predicated region
  $region38: #{cnn_critic_forward.1} parent=0 // pred_check
    _
  $region39: #{cnn_critic_forward.1} parent=0 // pred_check_branch
    %43 = sbr.rel (0) target = $region41
  $region40: #{cnn_critic_forward.1} parent=0 // pred_region
    _
  $region41: #{cnn_critic_forward.1} parent=0 // pred_fallthru
    _
  // Predicated region
  $region42: #{cnn_critic_forward.1} parent=0 // pred_check
    _
  $region43: #{cnn_critic_forward.1} parent=0 // pred_check_branch
    %45 = sbr.rel (0) target = $region45
  $region44: #{cnn_critic_forward.1} parent=0 // pred_region
    _
  $region45: #{cnn_critic_forward.1} parent=0 // pred_fallthru
    _
  // Predicated region
  $region46: #{cnn_critic_forward.1} parent=0 // pred_check
    _
  $region47: #{cnn_critic_forward.1} parent=0 // pred_check_branch
    %47 = sbr.rel (0) target = $region49
  $region48: #{cnn_critic_forward.1} parent=0 // pred_region
    _
  $region49: #{cnn_critic_forward.1} parent=0 // pred_fallthru
    _
  // Predicated region
  $region50: #{cnn_critic_forward.1} parent=0 // pred_check
    _
  $region51: #{cnn_critic_forward.1} parent=0 // pred_check_branch
    %49 = sbr.rel (0) target = $region53
  $region52: #{cnn_critic_forward.1} parent=0 // pred_region
    _
  $region53: #{cnn_critic_forward.1} parent=0 // pred_fallthru
    _
  // Predicated region
  $region54: #{cnn_critic_forward.1} parent=0 // pred_check
    _
  $region55: #{cnn_critic_forward.1} parent=0 // pred_check_branch
    %51 = sbr.rel (0) target = $region57
  $region56: #{cnn_critic_forward.1} parent=0 // pred_region
    _
  $region57: #{cnn_critic_forward.1} parent=0 // pred_fallthru
    _
  // Predicated region
  $region58: #{cnn_critic_forward.1} parent=0 // pred_check
    _
  $region59: #{cnn_critic_forward.1} parent=0 // pred_check_branch
    %53 = sbr.rel (0) target = $region61
  $region60: #{cnn_critic_forward.1} parent=0 // pred_region
    _
  $region61: #{cnn_critic_forward.1} parent=0 // pred_fallthru
    _
  // Predicated region
  $region62: #{cnn_critic_forward.1} parent=0 // pred_check
    _
  $region63: #{cnn_critic_forward.1} parent=0 // pred_check_branch
    %55 = sbr.rel (0) target = $region65
  $region64: #{cnn_critic_forward.1} parent=0 // pred_region
    _
  $region65: #{cnn_critic_forward.1} parent=0 // pred_fallthru
    _
  // Predicated region
  $region66: #{cnn_critic_forward.1} parent=0 // pred_check
    _
  $region67: #{cnn_critic_forward.1} parent=0 // pred_check_branch
    %57 = sbr.rel (0) target = $region69
  $region68: #{cnn_critic_forward.1} parent=0 // pred_region
    _
  $region69: #{cnn_critic_forward.1} parent=0 // pred_fallthru
    _
  // Predicated region
  $region70: #{cnn_critic_forward.1} parent=0 // pred_check
    _
  $region71: #{cnn_critic_forward.1} parent=0 // pred_check_branch
    %59 = sbr.rel (0) target = $region73
  $region72: #{cnn_critic_forward.1} parent=0 // pred_region
    _
  $region73: #{cnn_critic_forward.1} parent=0 // pred_fallthru
    _
  // Predicated region
  $region74: #{cnn_critic_forward.1} parent=0 // pred_check
    _
  $region75: #{cnn_critic_forward.1} parent=0 // pred_check_branch
    %61 = sbr.rel (0) target = $region77
  $region76: #{cnn_critic_forward.1} parent=0 // pred_region
    _
  $region77: #{cnn_critic_forward.1} parent=0 // pred_fallthru
    _
  %v63 = vld [vmem:[%s0] sm:$0xf]
  %v64 = vld [vmem:[%s3] sm:$0xff]
  %v65 = vld [vmem:[%s3 + $0x8] sm:$0xff]
  %v66 = vld [vmem:[%s3 + $0x10] sm:$0xff]
  %v67 = vld [vmem:[%s3 + $0x18] sm:$0xff]
  %v68 = vld [vmem:[%s3 + $0x20] sm:$0xff]
  %v69 = vld [vmem:[%s3 + $0x28] sm:$0xff]
  %v70 = vld [vmem:[%s3 + $0x30] sm:$0xff]
  %v71 = vld [vmem:[%s3 + $0x38] sm:$0xff]
  %v72 = vld [vmem:[%s3 + $0x40] sm:$0xff]
  %v73 = vld [vmem:[%s3 + $0x48] sm:$0xff]
  %v74 = vld [vmem:[%s3 + $0x50] sm:$0xff]
  %v75 = vld [vmem:[%s3 + $0x58] sm:$0xff]
  %v76 = vld [vmem:[%s3 + $0x60] sm:$0xff]
  %v77 = vld [vmem:[%s3 + $0x68] sm:$0xff]
  %v78 = vld [vmem:[%s3 + $0x70] sm:$0xff]
  %v79 = vld [vmem:[%s3 + $0x78] sm:$0xff]
  %v80 = vld [vmem:[%s3 + $0x80] sm:$0xff]
  %v81 = vld [vmem:[%s3 + $0x88] sm:$0xff]
  %v82 = vld [vmem:[%s3 + $0x90] sm:$0xff]
  %v83 = vld [vmem:[%s3 + $0x98] sm:$0xff]
  %v84 = vld [vmem:[%s3 + $0xa0] sm:$0xff]
  %v85 = vld [vmem:[%s3 + $0xa8] sm:$0xff]
  %v86 = vld [vmem:[%s3 + $0xb0] sm:$0xff]
  %v87 = vld [vmem:[%s3 + $0xb8] sm:$0xff]
  %s88 = scalar_lea.vmem %s0, 4
  %v89 = vld [vmem:[%s88] sm:$0xf]
  %s90 = scalar_lea.vmem %s3, 192
  %v91 = vld [vmem:[%s90] sm:$0xff]
  %v92 = vld [vmem:[%s90 + $0x8] sm:$0xff]
  %v93 = vld [vmem:[%s90 + $0x10] sm:$0xff]
  %v94 = vld [vmem:[%s90 + $0x18] sm:$0xff]
  %v95 = vld [vmem:[%s90 + $0x20] sm:$0xff]
  %v96 = vld [vmem:[%s90 + $0x28] sm:$0xff]
  %v97 = vld [vmem:[%s90 + $0x30] sm:$0xff]
  %v98 = vld [vmem:[%s90 + $0x38] sm:$0xff]
  %v99 = vld [vmem:[%s90 + $0x40] sm:$0xff]
  %v100 = vld [vmem:[%s90 + $0x48] sm:$0xff]
  %v101 = vld [vmem:[%s90 + $0x50] sm:$0xff]
  %v102 = vld [vmem:[%s90 + $0x58] sm:$0xff]
  %v103 = vld [vmem:[%s90 + $0x60] sm:$0xff]
  %v104 = vld [vmem:[%s90 + $0x68] sm:$0xff]
  %v105 = vld [vmem:[%s90 + $0x70] sm:$0xff]
  %v106 = vld [vmem:[%s90 + $0x78] sm:$0xff]
  %v107 = vld [vmem:[%s90 + $0x80] sm:$0xff]
  %v108 = vld [vmem:[%s90 + $0x88] sm:$0xff]
  %v109 = vld [vmem:[%s90 + $0x90] sm:$0xff]
  %v110 = vld [vmem:[%s90 + $0x98] sm:$0xff]
  %v111 = vld [vmem:[%s90 + $0xa0] sm:$0xff]
  %v112 = vld [vmem:[%s90 + $0xa8] sm:$0xff]
  %v113 = vld [vmem:[%s90 + $0xb0] sm:$0xff]
  %v114 = vld [vmem:[%s90 + $0xb8] sm:$0xff]
  %v117 = vunpack.c.l.s4 1983009808
  %v118 = vunpack.c.0.s8 %v117
  %v119 = vlaneseq
  %v120 = vshrl.u32 %v119, 7
  %v121 = vsub.s32 %v118, %v120
  %v122 = vrot.slane %v89, %v121
  %v123 = vcombine.high %v122, %v122
  %v149 = vunpack.c.l.b16 %v91
  %v150 = vunpack.c.h.b16 %v91
  %v151 = vunpack.c.l.b16 %v92
  %v152 = vunpack.c.h.b16 %v92
  %v153 = vunpack.c.l.b16 %v93
  %v154 = vunpack.c.h.b16 %v93
  %v155 = vunpack.c.l.b16 %v94
  %v156 = vunpack.c.h.b16 %v94
  %v157 = vunpack.c.l.b16 %v95
  %v158 = vunpack.c.h.b16 %v95
  %v159 = vunpack.c.l.b16 %v96
  %v160 = vunpack.c.h.b16 %v96
  %v161 = vunpack.c.l.b16 %v97
  %v162 = vunpack.c.h.b16 %v97
  %v163 = vunpack.c.l.b16 %v98
  %v164 = vunpack.c.h.b16 %v98
  %v165 = vunpack.c.l.b16 %v99
  %v166 = vunpack.c.h.b16 %v99
  %v167 = vunpack.c.l.b16 %v100
  %v168 = vunpack.c.h.b16 %v100
  %v169 = vunpack.c.l.b16 %v101
  %v170 = vunpack.c.h.b16 %v101
  %v171 = vunpack.c.l.b16 %v102
  %v172 = vunpack.c.h.b16 %v102
  %v173 = vunpack.c.l.b16 %v103
  %v174 = vunpack.c.h.b16 %v103
  %v175 = vunpack.c.l.b16 %v104
  %v176 = vunpack.c.h.b16 %v104
  %v177 = vunpack.c.l.b16 %v105
  %v178 = vunpack.c.h.b16 %v105
  %v179 = vunpack.c.l.b16 %v106
  %v180 = vunpack.c.h.b16 %v106
  %v181 = vunpack.c.l.b16 %v107
  %v182 = vunpack.c.h.b16 %v107
  %v183 = vunpack.c.l.b16 %v108
  %v184 = vunpack.c.h.b16 %v108
  %v185 = vunpack.c.l.b16 %v109
  %v186 = vunpack.c.h.b16 %v109
  %v187 = vunpack.c.l.b16 %v110
  %v188 = vunpack.c.h.b16 %v110
  %v189 = vunpack.c.l.b16 %v111
  %v190 = vunpack.c.h.b16 %v111
  %v191 = vunpack.c.l.b16 %v112
  %v192 = vunpack.c.h.b16 %v112
  %v193 = vunpack.c.l.b16 %v113
  %v194 = vunpack.c.h.b16 %v113
  %v195 = vunpack.c.l.b16 %v114
  %v196 = vunpack.c.h.b16 %v114
  %v197 = vpack.c.b16 %v151, %v149
  %v198 = vpack.c.b16 %v152, %v150
  %v199 = vpack.c.b16 %v155, %v153
  %v200 = vpack.c.b16 %v156, %v154
  %v201 = vpack.c.b16 %v159, %v157
  %v202 = vpack.c.b16 %v160, %v158
  %v203 = vpack.c.b16 %v163, %v161
  %v204 = vpack.c.b16 %v164, %v162
  %v205 = vpack.c.b16 %v167, %v165
  %v206 = vpack.c.b16 %v168, %v166
  %v207 = vpack.c.b16 %v171, %v169
  %v208 = vpack.c.b16 %v172, %v170
  %v209 = vpack.c.b16 %v175, %v173
  %v210 = vpack.c.b16 %v176, %v174
  %v211 = vpack.c.b16 %v179, %v177
  %v212 = vpack.c.b16 %v180, %v178
  %v213 = vpack.c.b16 %v183, %v181
  %v214 = vpack.c.b16 %v184, %v182
  %v215 = vpack.c.b16 %v187, %v185
  %v216 = vpack.c.b16 %v188, %v186
  %v217 = vpack.c.b16 %v191, %v189
  %v218 = vpack.c.b16 %v192, %v190
  %v219 = vpack.c.b16 %v195, %v193
  %v220 = vpack.c.b16 %v196, %v194
  %vm245 = vcmask 523264
  %v247 = vsel %vm245, %v123, 0
  %249 = vmatprep.subr.bf16.mxu0 %v212
  %250 = vmatpush1.bf16.msra.mxu0 %v211
  %251 = vmatprep.subr.bf16.mxu0 %v210
  %252 = vmatpush1.bf16.msra.mxu0 %v209
  %253 = vmatprep.subr.bf16.mxu0 %v208
  %254 = vmatpush1.bf16.msra.mxu0 %v207
  %255 = vmatprep.subr.bf16.mxu0 %v206
  %256 = vmatpush1.bf16.msra.mxu0 %v205
  %257 = vmatprep.subr.bf16.mxu0 %v204
  %258 = vmatpush1.bf16.msra.mxu0 %v203
  %259 = vmatprep.subr.bf16.mxu0 %v202
  %260 = vmatpush1.bf16.msra.mxu0 %v201
  %261 = vmatprep.subr.bf16.mxu0 %v200
  %262 = vmatpush1.bf16.msra.mxu0 %v199
  %263 = vmatprep.subr.bf16.mxu0 %v198
  %264 = vmatpush1.bf16.msra.mxu0 %v197
  %265 = vmatprep.subr.bf16.mxu0 0
  %266 = vmatpush2.bf16.msra.mxu0 0
  %267 = vmatprep.subr.bf16.mxu0 0
  %268 = vmatpush2.bf16.msra.mxu0 0
  %269 = vmatprep.subr.bf16.mxu0 0
  %270 = vmatpush2.bf16.msra.mxu0 0
  %271 = vmatprep.subr.bf16.mxu0 0
  %272 = vmatpush2.bf16.msra.mxu0 0
  %273 = vmatprep.subr.bf16.mxu0 %v220
  %274 = vmatpush2.bf16.msra.mxu0 %v219
  %275 = vmatprep.subr.bf16.mxu0 %v218
  %276 = vmatpush2.bf16.msra.mxu0 %v217
  %277 = vmatprep.subr.bf16.mxu0 %v216
  %278 = vmatpush2.bf16.msra.mxu0 %v215
  %279 = vmatprep.subr.bf16.mxu0 %v214
  %280 = vmatpush2.bf16.msra.mxu0 %v213
  %281 = vmatprep.mubr.bf16.mxu0 %v247
  %282 = vmatmul.mubr.bf16.gmra.mxu0 %v122
  %v283 = vpop.f32.mrf.mxu0
  %v284 = vadd.f32 0.0, %v283
  %v285 = vpop.f32.mrf.mxu0
  %v286 = vadd.f32 0.0, %v285
  %v287 = vpop.f32.mrf.mxu0
  %v288 = vpop.f32.mrf.mxu0
  %289 = vdwg.mxu0
  %v292 = vunpack.c.l.s4 1983009808
  %v293 = vunpack.c.0.s8 %v292
  %v294 = vlaneseq
  %v295 = vshrl.u32 %v294, 7
  %v296 = vsub.s32 %v293, %v295
  %v297 = vrot.slane %v63, %v296
  %v298 = vcombine.high %v297, %v297
  %v324 = vunpack.c.l.b16 %v64
  %v325 = vunpack.c.h.b16 %v64
  %v326 = vunpack.c.l.b16 %v65
  %v327 = vunpack.c.h.b16 %v65
  %v328 = vunpack.c.l.b16 %v66
  %v329 = vunpack.c.h.b16 %v66
  %v330 = vunpack.c.l.b16 %v67
  %v331 = vunpack.c.h.b16 %v67
  %v332 = vunpack.c.l.b16 %v68
  %v333 = vunpack.c.h.b16 %v68
  %v334 = vunpack.c.l.b16 %v69
  %v335 = vunpack.c.h.b16 %v69
  %v336 = vunpack.c.l.b16 %v70
  %v337 = vunpack.c.h.b16 %v70
  %v338 = vunpack.c.l.b16 %v71
  %v339 = vunpack.c.h.b16 %v71
  %v340 = vunpack.c.l.b16 %v72
  %v341 = vunpack.c.h.b16 %v72
  %v342 = vunpack.c.l.b16 %v73
  %v343 = vunpack.c.h.b16 %v73
  %v344 = vunpack.c.l.b16 %v74
  %v345 = vunpack.c.h.b16 %v74
  %v346 = vunpack.c.l.b16 %v75
  %v347 = vunpack.c.h.b16 %v75
  %v348 = vunpack.c.l.b16 %v76
  %v349 = vunpack.c.h.b16 %v76
  %v350 = vunpack.c.l.b16 %v77
  %v351 = vunpack.c.h.b16 %v77
  %v352 = vunpack.c.l.b16 %v78
  %v353 = vunpack.c.h.b16 %v78
  %v354 = vunpack.c.l.b16 %v79
  %v355 = vunpack.c.h.b16 %v79
  %v356 = vunpack.c.l.b16 %v80
  %v357 = vunpack.c.h.b16 %v80
  %v358 = vunpack.c.l.b16 %v81
  %v359 = vunpack.c.h.b16 %v81
  %v360 = vunpack.c.l.b16 %v82
  %v361 = vunpack.c.h.b16 %v82
  %v362 = vunpack.c.l.b16 %v83
  %v363 = vunpack.c.h.b16 %v83
  %v364 = vunpack.c.l.b16 %v84
  %v365 = vunpack.c.h.b16 %v84
  %v366 = vunpack.c.l.b16 %v85
  %v367 = vunpack.c.h.b16 %v85
  %v368 = vunpack.c.l.b16 %v86
  %v369 = vunpack.c.h.b16 %v86
  %v370 = vunpack.c.l.b16 %v87
  %v371 = vunpack.c.h.b16 %v87
  %v372 = vpack.c.b16 %v326, %v324
  %v373 = vpack.c.b16 %v327, %v325
  %v374 = vpack.c.b16 %v330, %v328
  %v375 = vpack.c.b16 %v331, %v329
  %v376 = vpack.c.b16 %v334, %v332
  %v377 = vpack.c.b16 %v335, %v333
  %v378 = vpack.c.b16 %v338, %v336
  %v379 = vpack.c.b16 %v339, %v337
  %v380 = vpack.c.b16 %v342, %v340
  %v381 = vpack.c.b16 %v343, %v341
  %v382 = vpack.c.b16 %v346, %v344
  %v383 = vpack.c.b16 %v347, %v345
  %v384 = vpack.c.b16 %v350, %v348
  %v385 = vpack.c.b16 %v351, %v349
  %v386 = vpack.c.b16 %v354, %v352
  %v387 = vpack.c.b16 %v355, %v353
  %v388 = vpack.c.b16 %v358, %v356
  %v389 = vpack.c.b16 %v359, %v357
  %v390 = vpack.c.b16 %v362, %v360
  %v391 = vpack.c.b16 %v363, %v361
  %v392 = vpack.c.b16 %v366, %v364
  %v393 = vpack.c.b16 %v367, %v365
  %v394 = vpack.c.b16 %v370, %v368
  %v395 = vpack.c.b16 %v371, %v369
  %v421 = vsel %vm245, %v298, 0
  %423 = vmatprep.subr.bf16.mxu0 %v387
  %424 = vmatpush1.bf16.msra.mxu0 %v386
  %425 = vmatprep.subr.bf16.mxu0 %v385
  %426 = vmatpush1.bf16.msra.mxu0 %v384
  %427 = vmatprep.subr.bf16.mxu0 %v383
  %428 = vmatpush1.bf16.msra.mxu0 %v382
  %429 = vmatprep.subr.bf16.mxu0 %v381
  %430 = vmatpush1.bf16.msra.mxu0 %v380
  %431 = vmatprep.subr.bf16.mxu0 %v379
  %432 = vmatpush1.bf16.msra.mxu0 %v378
  %433 = vmatprep.subr.bf16.mxu0 %v377
  %434 = vmatpush1.bf16.msra.mxu0 %v376
  %435 = vmatprep.subr.bf16.mxu0 %v375
  %436 = vmatpush1.bf16.msra.mxu0 %v374
  %437 = vmatprep.subr.bf16.mxu0 %v373
  %438 = vmatpush1.bf16.msra.mxu0 %v372
  %439 = vmatprep.subr.bf16.mxu0 0
  %440 = vmatpush2.bf16.msra.mxu0 0
  %441 = vmatprep.subr.bf16.mxu0 0
  %442 = vmatpush2.bf16.msra.mxu0 0
  %443 = vmatprep.subr.bf16.mxu0 0
  %444 = vmatpush2.bf16.msra.mxu0 0
  %445 = vmatprep.subr.bf16.mxu0 0
  %446 = vmatpush2.bf16.msra.mxu0 0
  %447 = vmatprep.subr.bf16.mxu0 %v395
  %448 = vmatpush2.bf16.msra.mxu0 %v394
  %449 = vmatprep.subr.bf16.mxu0 %v393
  %450 = vmatpush2.bf16.msra.mxu0 %v392
  %451 = vmatprep.subr.bf16.mxu0 %v391
  %452 = vmatpush2.bf16.msra.mxu0 %v390
  %453 = vmatprep.subr.bf16.mxu0 %v389
  %454 = vmatpush2.bf16.msra.mxu0 %v388
  %455 = vmatprep.mubr.bf16.mxu0 %v421
  %456 = vmatmul.mubr.bf16.gmra.mxu0 %v297
  %v457 = vpop.f32.mrf.mxu0
  %v458 = vadd.f32 %v284, %v457
  %v459 = vpop.f32.mrf.mxu0
  %v460 = vadd.f32 %v286, %v459
  %v461 = vpop.f32.mrf.mxu0
  %v462 = vpop.f32.mrf.mxu0
  %463 = vdwg.mxu0
  %s464 = scalar_lea.vmem %s0, 8
  %v465 = vld [vmem:[%s464] sm:$0xf]
  %s466 = scalar_lea.vmem %s3, 384
  %v467 = vld [vmem:[%s466] sm:$0xff]
  %v468 = vld [vmem:[%s466 + $0x8] sm:$0xff]
  %v469 = vld [vmem:[%s466 + $0x10] sm:$0xff]
  %v470 = vld [vmem:[%s466 + $0x18] sm:$0xff]
  %v471 = vld [vmem:[%s466 + $0x20] sm:$0xff]
  %v472 = vld [vmem:[%s466 + $0x28] sm:$0xff]
  %v473 = vld [vmem:[%s466 + $0x30] sm:$0xff]
  %v474 = vld [vmem:[%s466 + $0x38] sm:$0xff]
  %v475 = vld [vmem:[%s466 + $0x40] sm:$0xff]
  %v476 = vld [vmem:[%s466 + $0x48] sm:$0xff]
  %v477 = vld [vmem:[%s466 + $0x50] sm:$0xff]
  %v478 = vld [vmem:[%s466 + $0x58] sm:$0xff]
  %v479 = vld [vmem:[%s466 + $0x60] sm:$0xff]
  %v480 = vld [vmem:[%s466 + $0x68] sm:$0xff]
  %v481 = vld [vmem:[%s466 + $0x70] sm:$0xff]
  %v482 = vld [vmem:[%s466 + $0x78] sm:$0xff]
  %v483 = vld [vmem:[%s466 + $0x80] sm:$0xff]
  %v484 = vld [vmem:[%s466 + $0x88] sm:$0xff]
  %v485 = vld [vmem:[%s466 + $0x90] sm:$0xff]
  %v486 = vld [vmem:[%s466 + $0x98] sm:$0xff]
  %v487 = vld [vmem:[%s466 + $0xa0] sm:$0xff]
  %v488 = vld [vmem:[%s466 + $0xa8] sm:$0xff]
  %v489 = vld [vmem:[%s466 + $0xb0] sm:$0xff]
  %v490 = vld [vmem:[%s466 + $0xb8] sm:$0xff]
  %v493 = vunpack.c.l.s4 1983009808
  %v494 = vunpack.c.0.s8 %v493
  %v495 = vlaneseq
  %v496 = vshrl.u32 %v495, 7
  %v497 = vsub.s32 %v494, %v496
  %v498 = vrot.slane %v465, %v497
  %v499 = vcombine.high %v498, %v498
  %v525 = vunpack.c.l.b16 %v467
  %v526 = vunpack.c.h.b16 %v467
  %v527 = vunpack.c.l.b16 %v468
  %v528 = vunpack.c.h.b16 %v468
  %v529 = vunpack.c.l.b16 %v469
  %v530 = vunpack.c.h.b16 %v469
  %v531 = vunpack.c.l.b16 %v470
  %v532 = vunpack.c.h.b16 %v470
  %v533 = vunpack.c.l.b16 %v471
  %v534 = vunpack.c.h.b16 %v471
  %v535 = vunpack.c.l.b16 %v472
  %v536 = vunpack.c.h.b16 %v472
  %v537 = vunpack.c.l.b16 %v473
  %v538 = vunpack.c.h.b16 %v473
  %v539 = vunpack.c.l.b16 %v474
  %v540 = vunpack.c.h.b16 %v474
  %v541 = vunpack.c.l.b16 %v475
  %v542 = vunpack.c.h.b16 %v475
  %v543 = vunpack.c.l.b16 %v476
  %v544 = vunpack.c.h.b16 %v476
  %v545 = vunpack.c.l.b16 %v477
  %v546 = vunpack.c.h.b16 %v477
  %v547 = vunpack.c.l.b16 %v478
  %v548 = vunpack.c.h.b16 %v478
  %v549 = vunpack.c.l.b16 %v479
  %v550 = vunpack.c.h.b16 %v479
  %v551 = vunpack.c.l.b16 %v480
  %v552 = vunpack.c.h.b16 %v480
  %v553 = vunpack.c.l.b16 %v481
  %v554 = vunpack.c.h.b16 %v481
  %v555 = vunpack.c.l.b16 %v482
  %v556 = vunpack.c.h.b16 %v482
  %v557 = vunpack.c.l.b16 %v483
  %v558 = vunpack.c.h.b16 %v483
  %v559 = vunpack.c.l.b16 %v484
  %v560 = vunpack.c.h.b16 %v484
  %v561 = vunpack.c.l.b16 %v485
  %v562 = vunpack.c.h.b16 %v485
  %v563 = vunpack.c.l.b16 %v486
  %v564 = vunpack.c.h.b16 %v486
  %v565 = vunpack.c.l.b16 %v487
  %v566 = vunpack.c.h.b16 %v487
  %v567 = vunpack.c.l.b16 %v488
  %v568 = vunpack.c.h.b16 %v488
  %v569 = vunpack.c.l.b16 %v489
  %v570 = vunpack.c.h.b16 %v489
  %v571 = vunpack.c.l.b16 %v490
  %v572 = vunpack.c.h.b16 %v490
  %v573 = vpack.c.b16 %v527, %v525
  %v574 = vpack.c.b16 %v528, %v526
  %v575 = vpack.c.b16 %v531, %v529
  %v576 = vpack.c.b16 %v532, %v530
  %v577 = vpack.c.b16 %v535, %v533
  %v578 = vpack.c.b16 %v536, %v534
  %v579 = vpack.c.b16 %v539, %v537
  %v580 = vpack.c.b16 %v540, %v538
  %v581 = vpack.c.b16 %v543, %v541
  %v582 = vpack.c.b16 %v544, %v542
  %v583 = vpack.c.b16 %v547, %v545
  %v584 = vpack.c.b16 %v548, %v546
  %v585 = vpack.c.b16 %v551, %v549
  %v586 = vpack.c.b16 %v552, %v550
  %v587 = vpack.c.b16 %v555, %v553
  %v588 = vpack.c.b16 %v556, %v554
  %v589 = vpack.c.b16 %v559, %v557
  %v590 = vpack.c.b16 %v560, %v558
  %v591 = vpack.c.b16 %v563, %v561
  %v592 = vpack.c.b16 %v564, %v562
  %v593 = vpack.c.b16 %v567, %v565
  %v594 = vpack.c.b16 %v568, %v566
  %v595 = vpack.c.b16 %v571, %v569
  %v596 = vpack.c.b16 %v572, %v570
  %v622 = vsel %vm245, %v499, 0
  %624 = vmatprep.subr.bf16.mxu0 %v588
  %625 = vmatpush1.bf16.msra.mxu0 %v587
  %626 = vmatprep.subr.bf16.mxu0 %v586
  %627 = vmatpush1.bf16.msra.mxu0 %v585
  %628 = vmatprep.subr.bf16.mxu0 %v584
  %629 = vmatpush1.bf16.msra.mxu0 %v583
  %630 = vmatprep.subr.bf16.mxu0 %v582
  %631 = vmatpush1.bf16.msra.mxu0 %v581
  %632 = vmatprep.subr.bf16.mxu0 %v580
  %633 = vmatpush1.bf16.msra.mxu0 %v579
  %634 = vmatprep.subr.bf16.mxu0 %v578
  %635 = vmatpush1.bf16.msra.mxu0 %v577
  %636 = vmatprep.subr.bf16.mxu0 %v576
  %637 = vmatpush1.bf16.msra.mxu0 %v575
  %638 = vmatprep.subr.bf16.mxu0 %v574
  %639 = vmatpush1.bf16.msra.mxu0 %v573
  %640 = vmatprep.subr.bf16.mxu0 0
  %641 = vmatpush2.bf16.msra.mxu0 0
  %642 = vmatprep.subr.bf16.mxu0 0
  %643 = vmatpush2.bf16.msra.mxu0 0
  %644 = vmatprep.subr.bf16.mxu0 0
  %645 = vmatpush2.bf16.msra.mxu0 0
  %646 = vmatprep.subr.bf16.mxu0 0
  %647 = vmatpush2.bf16.msra.mxu0 0
  %648 = vmatprep.subr.bf16.mxu0 %v596
  %649 = vmatpush2.bf16.msra.mxu0 %v595
  %650 = vmatprep.subr.bf16.mxu0 %v594
  %651 = vmatpush2.bf16.msra.mxu0 %v593
  %652 = vmatprep.subr.bf16.mxu0 %v592
  %653 = vmatpush2.bf16.msra.mxu0 %v591
  %654 = vmatprep.subr.bf16.mxu0 %v590
  %655 = vmatpush2.bf16.msra.mxu0 %v589
  %656 = vmatprep.mubr.bf16.mxu0 %v622
  %657 = vmatmul.mubr.bf16.gmra.mxu0 %v498
  %v658 = vpop.f32.mrf.mxu0
  %v659 = vadd.f32 0.0, %v658
  %v660 = vpop.f32.mrf.mxu0
  %v661 = vadd.f32 0.0, %v660
  %v662 = vpop.f32.mrf.mxu0
  %v663 = vpop.f32.mrf.mxu0
  %664 = vdwg.mxu0
  %v665 = vadd.f32 %v458, %v659
  %v666 = vadd.f32 %v460, %v661
  %v667 = vld [vmem:[%s464] sm:$0xf]
  %s668 = scalar_lea.vmem %s0, 12
  %v669 = vld [vmem:[%s668] sm:$0xf]
  %v672 = vunpack.c.l.s4 1983009808
  %v673 = vunpack.c.0.s8 %v672
  %v674 = vlaneseq
  %v675 = vshrl.u32 %v674, 7
  %v676 = vsub.s32 %v673, %v675
  %v677 = vrot.slane %v669, %v676
  %v678 = vcombine.high %v677, %v677
  %v681 = vsel %vm245, %v678, 0
  %683 = vmatprep.subr.bf16.mxu0 %v212
  %684 = vmatpush1.bf16.msra.mxu0 %v211
  %685 = vmatprep.subr.bf16.mxu0 %v210
  %686 = vmatpush1.bf16.msra.mxu0 %v209
  %687 = vmatprep.subr.bf16.mxu0 %v208
  %688 = vmatpush1.bf16.msra.mxu0 %v207
  %689 = vmatprep.subr.bf16.mxu0 %v206
  %690 = vmatpush1.bf16.msra.mxu0 %v205
  %691 = vmatprep.subr.bf16.mxu0 %v204
  %692 = vmatpush1.bf16.msra.mxu0 %v203
  %693 = vmatprep.subr.bf16.mxu0 %v202
  %694 = vmatpush1.bf16.msra.mxu0 %v201
  %695 = vmatprep.subr.bf16.mxu0 %v200
  %696 = vmatpush1.bf16.msra.mxu0 %v199
  %697 = vmatprep.subr.bf16.mxu0 %v198
  %698 = vmatpush1.bf16.msra.mxu0 %v197
  %699 = vmatprep.subr.bf16.mxu0 0
  %700 = vmatpush2.bf16.msra.mxu0 0
  %701 = vmatprep.subr.bf16.mxu0 0
  %702 = vmatpush2.bf16.msra.mxu0 0
  %703 = vmatprep.subr.bf16.mxu0 0
  %704 = vmatpush2.bf16.msra.mxu0 0
  %705 = vmatprep.subr.bf16.mxu0 0
  %706 = vmatpush2.bf16.msra.mxu0 0
  %707 = vmatprep.subr.bf16.mxu0 %v220
  %708 = vmatpush2.bf16.msra.mxu0 %v219
  %709 = vmatprep.subr.bf16.mxu0 %v218
  %710 = vmatpush2.bf16.msra.mxu0 %v217
  %711 = vmatprep.subr.bf16.mxu0 %v216
  %712 = vmatpush2.bf16.msra.mxu0 %v215
  %713 = vmatprep.subr.bf16.mxu0 %v214
  %714 = vmatpush2.bf16.msra.mxu0 %v213
  %715 = vmatprep.mubr.bf16.mxu0 %v681
  %716 = vmatmul.mubr.bf16.gmra.mxu0 %v677
  %v717 = vpop.f32.mrf.mxu0
  %v718 = vadd.f32 0.0, %v717
  %v719 = vpop.f32.mrf.mxu0
  %v720 = vadd.f32 0.0, %v719
  %v721 = vpop.f32.mrf.mxu0
  %v722 = vpop.f32.mrf.mxu0
  %723 = vdwg.mxu0
  %v726 = vunpack.c.l.s4 1983009808
  %v727 = vunpack.c.0.s8 %v726
  %v728 = vlaneseq
  %v729 = vshrl.u32 %v728, 7
  %v730 = vsub.s32 %v727, %v729
  %v731 = vrot.slane %v667, %v730
  %v732 = vcombine.high %v731, %v731
  %v735 = vsel %vm245, %v732, 0
  %737 = vmatprep.subr.bf16.mxu0 %v387
  %738 = vmatpush1.bf16.msra.mxu0 %v386
  %739 = vmatprep.subr.bf16.mxu0 %v385
  %740 = vmatpush1.bf16.msra.mxu0 %v384
  %741 = vmatprep.subr.bf16.mxu0 %v383
  %742 = vmatpush1.bf16.msra.mxu0 %v382
  %743 = vmatprep.subr.bf16.mxu0 %v381
  %744 = vmatpush1.bf16.msra.mxu0 %v380
  %745 = vmatprep.subr.bf16.mxu0 %v379
  %746 = vmatpush1.bf16.msra.mxu0 %v378
  %747 = vmatprep.subr.bf16.mxu0 %v377
  %748 = vmatpush1.bf16.msra.mxu0 %v376
  %749 = vmatprep.subr.bf16.mxu0 %v375
  %750 = vmatpush1.bf16.msra.mxu0 %v374
  %751 = vmatprep.subr.bf16.mxu0 %v373
  %752 = vmatpush1.bf16.msra.mxu0 %v372
  %753 = vmatprep.subr.bf16.mxu0 0
  %754 = vmatpush2.bf16.msra.mxu0 0
  %755 = vmatprep.subr.bf16.mxu0 0
  %756 = vmatpush2.bf16.msra.mxu0 0
  %757 = vmatprep.subr.bf16.mxu0 0
  %758 = vmatpush2.bf16.msra.mxu0 0
  %759 = vmatprep.subr.bf16.mxu0 0
  %760 = vmatpush2.bf16.msra.mxu0 0
  %761 = vmatprep.subr.bf16.mxu0 %v395
  %762 = vmatpush2.bf16.msra.mxu0 %v394
  %763 = vmatprep.subr.bf16.mxu0 %v393
  %764 = vmatpush2.bf16.msra.mxu0 %v392
  %765 = vmatprep.subr.bf16.mxu0 %v391
  %766 = vmatpush2.bf16.msra.mxu0 %v390
  %767 = vmatprep.subr.bf16.mxu0 %v389
  %768 = vmatpush2.bf16.msra.mxu0 %v388
  %769 = vmatprep.mubr.bf16.mxu0 %v735
  %770 = vmatmul.mubr.bf16.gmra.mxu0 %v731
  %v771 = vpop.f32.mrf.mxu0
  %v772 = vadd.f32 %v718, %v771
  %v773 = vpop.f32.mrf.mxu0
  %v774 = vadd.f32 %v720, %v773
  %v775 = vpop.f32.mrf.mxu0
  %v776 = vpop.f32.mrf.mxu0
  %777 = vdwg.mxu0
  %v778 = vld [vmem:[%s0] sm:$0xf]
  %v781 = vunpack.c.l.s4 1983009808
  %v782 = vunpack.c.0.s8 %v781
  %v783 = vlaneseq
  %v784 = vshrl.u32 %v783, 7
  %v785 = vsub.s32 %v782, %v784
  %v786 = vrot.slane %v778, %v785
  %v787 = vcombine.high %v786, %v786
  %v789 = vshrl.u32 %v786, 16
  %v791 = vshll.u32 %v786, 16
  %v793 = vrot.slane %v791, 1
  %v794 = vor.u32 %v789, %v793
  %v796 = vshrl.u32 %v787, 16
  %v798 = vshll.u32 %v787, 16
  %v800 = vrot.slane %v798, 1
  %v801 = vor.u32 %v796, %v800
  %v804 = vsel %vm245, %v801, 0
  %806 = vmatprep.subr.bf16.mxu0 %v588
  %807 = vmatpush1.bf16.msra.mxu0 %v587
  %808 = vmatprep.subr.bf16.mxu0 %v586
  %809 = vmatpush1.bf16.msra.mxu0 %v585
  %810 = vmatprep.subr.bf16.mxu0 %v584
  %811 = vmatpush1.bf16.msra.mxu0 %v583
  %812 = vmatprep.subr.bf16.mxu0 %v582
  %813 = vmatpush1.bf16.msra.mxu0 %v581
  %814 = vmatprep.subr.bf16.mxu0 %v580
  %815 = vmatpush1.bf16.msra.mxu0 %v579
  %816 = vmatprep.subr.bf16.mxu0 %v578
  %817 = vmatpush1.bf16.msra.mxu0 %v577
  %818 = vmatprep.subr.bf16.mxu0 %v576
  %819 = vmatpush1.bf16.msra.mxu0 %v575
  %820 = vmatprep.subr.bf16.mxu0 %v574
  %821 = vmatpush1.bf16.msra.mxu0 %v573
  %822 = vmatprep.subr.bf16.mxu0 0
  %823 = vmatpush2.bf16.msra.mxu0 0
  %824 = vmatprep.subr.bf16.mxu0 0
  %825 = vmatpush2.bf16.msra.mxu0 0
  %826 = vmatprep.subr.bf16.mxu0 0
  %827 = vmatpush2.bf16.msra.mxu0 0
  %828 = vmatprep.subr.bf16.mxu0 0
  %829 = vmatpush2.bf16.msra.mxu0 0
  %830 = vmatprep.subr.bf16.mxu0 %v596
  %831 = vmatpush2.bf16.msra.mxu0 %v595
  %832 = vmatprep.subr.bf16.mxu0 %v594
  %833 = vmatpush2.bf16.msra.mxu0 %v593
  %834 = vmatprep.subr.bf16.mxu0 %v592
  %835 = vmatpush2.bf16.msra.mxu0 %v591
  %836 = vmatprep.subr.bf16.mxu0 %v590
  %837 = vmatpush2.bf16.msra.mxu0 %v589
  %838 = vmatprep.mubr.bf16.mxu0 %v804
  %839 = vmatmul.mubr.bf16.gmra.mxu0 %v794
  %v840 = vpop.f32.mrf.mxu0
  %v841 = vadd.f32 0.0, %v840
  %v842 = vpop.f32.mrf.mxu0
  %v843 = vadd.f32 0.0, %v842
  %v844 = vpop.f32.mrf.mxu0
  %v845 = vpop.f32.mrf.mxu0
  %846 = vdwg.mxu0
  %v847 = vadd.f32 %v772, %v841
  %v848 = vadd.f32 %v774, %v843
  %v849 = vld [vmem:[%s4] sm:$0x3]
  %v851 = vlaneseq
  %v852 = vshrl.u32 %v851, 7
  %v853 = vsub.s32 0, %v852
  %v854 = vrot.slane %v849, %v853
  %v855 = vlaneseq
  %v856 = vshrl.u32 %v855, 7
  %v857 = vsub.s32 1, %v856
  %v858 = vrot.slane %v849, %v857
  %v861 = vadd.f32 %v665, %v854
  %v862 = vadd.f32 %v666, %v858
  %v863 = vmax.f32 %v861, 0.0
  %v864 = vmax.f32 %v862, 0.0
  %v865 = vadd.f32 %v847, %v854
  %v866 = vadd.f32 %v848, %v858
  %v867 = vmax.f32 %v865, 0.0
  %v868 = vmax.f32 %v866, 0.0
  %v869 = vld [vmem:[%s5] sm:$0xff]
  %v870 = vld [vmem:[%s5 + $0x8] sm:$0xff]
  %v871 = vld [vmem:[%s5 + $0x10] sm:$0xff]
  %v872 = vld [vmem:[%s5 + $0x18] sm:$0xff]
  %v873 = vld [vmem:[%s5 + $0x20] sm:$0xff]
  %v874 = vld [vmem:[%s5 + $0x28] sm:$0xff]
  %v875 = vld [vmem:[%s5 + $0x30] sm:$0xff]
  %v876 = vld [vmem:[%s5 + $0x38] sm:$0xff]
  %v877 = vld [vmem:[%s5 + $0x40] sm:$0xff]
  %v878 = vld [vmem:[%s5 + $0x48] sm:$0xff]
  %v879 = vld [vmem:[%s5 + $0x50] sm:$0xff]
  %v880 = vld [vmem:[%s5 + $0x58] sm:$0xff]
  %v881 = vld [vmem:[%s5 + $0x60] sm:$0xff]
  %v882 = vld [vmem:[%s5 + $0x68] sm:$0xff]
  %v883 = vld [vmem:[%s5 + $0x70] sm:$0xff]
  %v884 = vld [vmem:[%s5 + $0x78] sm:$0xff]
  %v885 = vld [vmem:[%s5 + $0x80] sm:$0xff]
  %v886 = vld [vmem:[%s5 + $0x88] sm:$0xff]
  %v887 = vld [vmem:[%s5 + $0x90] sm:$0xff]
  %v888 = vld [vmem:[%s5 + $0x98] sm:$0xff]
  %v889 = vld [vmem:[%s5 + $0xa0] sm:$0xff]
  %v890 = vld [vmem:[%s5 + $0xa8] sm:$0xff]
  %v891 = vld [vmem:[%s5 + $0xb0] sm:$0xff]
  %v892 = vld [vmem:[%s5 + $0xb8] sm:$0xff]
  %v893 = vld [vmem:[%s5 + $0xc0] sm:$0xff]
  %v894 = vld [vmem:[%s5 + $0xc8] sm:$0xff]
  %v895 = vld [vmem:[%s5 + $0xd0] sm:$0xff]
  %v896 = vld [vmem:[%s5 + $0xd8] sm:$0xff]
  %v897 = vpack.c.bf16 %v863, %v863
  %v898 = vpack.c.bf16 %v864, %v864
  %s899 = scalar_lea.vmem %s5, 224
  %v900 = vld [vmem:[%s899] sm:$0xff]
  %v901 = vld [vmem:[%s899 + $0x8] sm:$0xff]
  %v902 = vld [vmem:[%s899 + $0x10] sm:$0xff]
  %v903 = vld [vmem:[%s899 + $0x18] sm:$0xff]
  %v904 = vld [vmem:[%s899 + $0x20] sm:$0xff]
  %v905 = vld [vmem:[%s899 + $0x28] sm:$0xff]
  %v906 = vld [vmem:[%s899 + $0x30] sm:$0xff]
  %v907 = vld [vmem:[%s899 + $0x38] sm:$0xff]
  %v908 = vld [vmem:[%s899 + $0x40] sm:$0xff]
  %v909 = vld [vmem:[%s899 + $0x48] sm:$0xff]
  %v910 = vld [vmem:[%s899 + $0x50] sm:$0xff]
  %v911 = vld [vmem:[%s899 + $0x58] sm:$0xff]
  %v912 = vld [vmem:[%s899 + $0x60] sm:$0xff]
  %v913 = vld [vmem:[%s899 + $0x68] sm:$0xff]
  %v914 = vld [vmem:[%s899 + $0x70] sm:$0xff]
  %v915 = vld [vmem:[%s899 + $0x78] sm:$0xff]
  %v916 = vld [vmem:[%s899 + $0x80] sm:$0xff]
  %v917 = vld [vmem:[%s899 + $0x88] sm:$0xff]
  %v918 = vld [vmem:[%s899 + $0x90] sm:$0xff]
  %v919 = vld [vmem:[%s899 + $0x98] sm:$0xff]
  %v920 = vld [vmem:[%s899 + $0xa0] sm:$0xff]
  %v921 = vld [vmem:[%s899 + $0xa8] sm:$0xff]
  %v922 = vld [vmem:[%s899 + $0xb0] sm:$0xff]
  %v923 = vld [vmem:[%s899 + $0xb8] sm:$0xff]
  %v924 = vld [vmem:[%s899 + $0xc0] sm:$0xff]
  %v925 = vld [vmem:[%s899 + $0xc8] sm:$0xff]
  %v926 = vld [vmem:[%s899 + $0xd0] sm:$0xff]
  %v927 = vld [vmem:[%s899 + $0xd8] sm:$0xff]
  %v928 = vpack.c.bf16 %v867, %v867
  %v929 = vpack.c.bf16 %v868, %v868
  %v958 = vunpack.c.l.b16 %v900
  %v959 = vunpack.c.h.b16 %v900
  %v960 = vunpack.c.l.b16 %v901
  %v961 = vunpack.c.h.b16 %v901
  %v962 = vunpack.c.l.b16 %v902
  %v963 = vunpack.c.h.b16 %v902
  %v964 = vunpack.c.l.b16 %v903
  %v965 = vunpack.c.h.b16 %v903
  %v966 = vunpack.c.l.b16 %v904
  %v967 = vunpack.c.h.b16 %v904
  %v968 = vunpack.c.l.b16 %v905
  %v969 = vunpack.c.h.b16 %v905
  %v970 = vunpack.c.l.b16 %v906
  %v971 = vunpack.c.h.b16 %v906
  %v972 = vunpack.c.l.b16 %v907
  %v973 = vunpack.c.h.b16 %v907
  %v974 = vunpack.c.l.b16 %v908
  %v975 = vunpack.c.h.b16 %v908
  %v976 = vunpack.c.l.b16 %v909
  %v977 = vunpack.c.h.b16 %v909
  %v978 = vunpack.c.l.b16 %v910
  %v979 = vunpack.c.h.b16 %v910
  %v980 = vunpack.c.l.b16 %v911
  %v981 = vunpack.c.h.b16 %v911
  %v982 = vunpack.c.l.b16 %v912
  %v983 = vunpack.c.h.b16 %v912
  %v984 = vunpack.c.l.b16 %v913
  %v985 = vunpack.c.h.b16 %v913
  %v986 = vunpack.c.l.b16 %v914
  %v987 = vunpack.c.h.b16 %v914
  %v988 = vunpack.c.l.b16 %v915
  %v989 = vunpack.c.h.b16 %v915
  %v990 = vunpack.c.l.b16 %v916
  %v991 = vunpack.c.h.b16 %v916
  %v992 = vunpack.c.l.b16 %v917
  %v993 = vunpack.c.h.b16 %v917
  %v994 = vunpack.c.l.b16 %v918
  %v995 = vunpack.c.h.b16 %v918
  %v996 = vunpack.c.l.b16 %v919
  %v997 = vunpack.c.h.b16 %v919
  %v998 = vunpack.c.l.b16 %v920
  %v999 = vunpack.c.h.b16 %v920
  %v1000 = vunpack.c.l.b16 %v921
  %v1001 = vunpack.c.h.b16 %v921
  %v1002 = vunpack.c.l.b16 %v922
  %v1003 = vunpack.c.h.b16 %v922
  %v1004 = vunpack.c.l.b16 %v923
  %v1005 = vunpack.c.h.b16 %v923
  %v1006 = vunpack.c.l.b16 %v924
  %v1007 = vunpack.c.h.b16 %v924
  %v1008 = vunpack.c.l.b16 %v925
  %v1009 = vunpack.c.h.b16 %v925
  %v1010 = vunpack.c.l.b16 %v926
  %v1011 = vunpack.c.h.b16 %v926
  %v1012 = vunpack.c.l.b16 %v927
  %v1013 = vunpack.c.h.b16 %v927
  %v1014 = vpack.c.b16 %v960, %v958
  %v1015 = vpack.c.b16 %v961, %v959
  %v1016 = vpack.c.b16 %v964, %v962
  %v1017 = vpack.c.b16 %v965, %v963
  %v1018 = vpack.c.b16 %v968, %v966
  %v1019 = vpack.c.b16 %v969, %v967
  %v1020 = vpack.c.b16 %v972, %v970
  %v1021 = vpack.c.b16 %v973, %v971
  %v1022 = vpack.c.b16 %v976, %v974
  %v1023 = vpack.c.b16 %v977, %v975
  %v1024 = vpack.c.b16 %v980, %v978
  %v1025 = vpack.c.b16 %v981, %v979
  %v1026 = vpack.c.b16 %v984, %v982
  %v1027 = vpack.c.b16 %v985, %v983
  %v1028 = vpack.c.b16 %v988, %v986
  %v1029 = vpack.c.b16 %v989, %v987
  %v1030 = vpack.c.b16 %v992, %v990
  %v1031 = vpack.c.b16 %v993, %v991
  %v1032 = vpack.c.b16 %v996, %v994
  %v1033 = vpack.c.b16 %v997, %v995
  %v1034 = vpack.c.b16 %v1000, %v998
  %v1035 = vpack.c.b16 %v1001, %v999
  %v1036 = vpack.c.b16 %v1004, %v1002
  %v1037 = vpack.c.b16 %v1005, %v1003
  %v1038 = vpack.c.b16 %v1008, %v1006
  %v1039 = vpack.c.b16 %v1009, %v1007
  %v1040 = vpack.c.b16 %v1012, %v1010
  %v1041 = vpack.c.b16 %v1013, %v1011
  %vm1070 = vcmask 785408
  %v1072 = vsel %vm1070, %v929, 0
  %1074 = vmatprep.subr.bf16.mxu0 %v1029
  %1075 = vmatpush1.bf16.msra.mxu0 %v1028
  %1076 = vmatprep.subr.bf16.mxu0 %v1027
  %1077 = vmatpush1.bf16.msra.mxu0 %v1026
  %1078 = vmatprep.subr.bf16.mxu0 %v1025
  %1079 = vmatpush1.bf16.msra.mxu0 %v1024
  %1080 = vmatprep.subr.bf16.mxu0 %v1023
  %1081 = vmatpush1.bf16.msra.mxu0 %v1022
  %1082 = vmatprep.subr.bf16.mxu0 %v1021
  %1083 = vmatpush1.bf16.msra.mxu0 %v1020
  %1084 = vmatprep.subr.bf16.mxu0 %v1019
  %1085 = vmatpush1.bf16.msra.mxu0 %v1018
  %1086 = vmatprep.subr.bf16.mxu0 %v1017
  %1087 = vmatpush1.bf16.msra.mxu0 %v1016
  %1088 = vmatprep.subr.bf16.mxu0 %v1015
  %1089 = vmatpush1.bf16.msra.mxu0 %v1014
  %1090 = vmatprep.subr.bf16.mxu0 0
  %1091 = vmatpush2.bf16.msra.mxu0 0
  %1092 = vmatprep.subr.bf16.mxu0 0
  %1093 = vmatpush2.bf16.msra.mxu0 0
  %1094 = vmatprep.subr.bf16.mxu0 %v1041
  %1095 = vmatpush2.bf16.msra.mxu0 %v1040
  %1096 = vmatprep.subr.bf16.mxu0 %v1039
  %1097 = vmatpush2.bf16.msra.mxu0 %v1038
  %1098 = vmatprep.subr.bf16.mxu0 %v1037
  %1099 = vmatpush2.bf16.msra.mxu0 %v1036
  %1100 = vmatprep.subr.bf16.mxu0 %v1035
  %1101 = vmatpush2.bf16.msra.mxu0 %v1034
  %1102 = vmatprep.subr.bf16.mxu0 %v1033
  %1103 = vmatpush2.bf16.msra.mxu0 %v1032
  %1104 = vmatprep.subr.bf16.mxu0 %v1031
  %1105 = vmatpush2.bf16.msra.mxu0 %v1030
  %1106 = vmatprep.mubr.bf16.mxu0 %v1072
  %1107 = vmatmul.mubr.bf16.gmra.mxu0 %v928
  %v1108 = vpop.f32.mrf.mxu0
  %v1109 = vadd.f32 0.0, %v1108
  %v1110 = vpop.f32.mrf.mxu0
  %v1111 = vadd.f32 0.0, %v1110
  %v1112 = vpop.f32.mrf.mxu0
  %v1113 = vpop.f32.mrf.mxu0
  %1114 = vdwg.mxu0
  %v1143 = vunpack.c.l.b16 %v869
  %v1144 = vunpack.c.h.b16 %v869
  %v1145 = vunpack.c.l.b16 %v870
  %v1146 = vunpack.c.h.b16 %v870
  %v1147 = vunpack.c.l.b16 %v871
  %v1148 = vunpack.c.h.b16 %v871
  %v1149 = vunpack.c.l.b16 %v872
  %v1150 = vunpack.c.h.b16 %v872
  %v1151 = vunpack.c.l.b16 %v873
  %v1152 = vunpack.c.h.b16 %v873
  %v1153 = vunpack.c.l.b16 %v874
  %v1154 = vunpack.c.h.b16 %v874
  %v1155 = vunpack.c.l.b16 %v875
  %v1156 = vunpack.c.h.b16 %v875
  %v1157 = vunpack.c.l.b16 %v876
  %v1158 = vunpack.c.h.b16 %v876
  %v1159 = vunpack.c.l.b16 %v877
  %v1160 = vunpack.c.h.b16 %v877
  %v1161 = vunpack.c.l.b16 %v878
  %v1162 = vunpack.c.h.b16 %v878
  %v1163 = vunpack.c.l.b16 %v879
  %v1164 = vunpack.c.h.b16 %v879
  %v1165 = vunpack.c.l.b16 %v880
  %v1166 = vunpack.c.h.b16 %v880
  %v1167 = vunpack.c.l.b16 %v881
  %v1168 = vunpack.c.h.b16 %v881
  %v1169 = vunpack.c.l.b16 %v882
  %v1170 = vunpack.c.h.b16 %v882
  %v1171 = vunpack.c.l.b16 %v883
  %v1172 = vunpack.c.h.b16 %v883
  %v1173 = vunpack.c.l.b16 %v884
  %v1174 = vunpack.c.h.b16 %v884
  %v1175 = vunpack.c.l.b16 %v885
  %v1176 = vunpack.c.h.b16 %v885
  %v1177 = vunpack.c.l.b16 %v886
  %v1178 = vunpack.c.h.b16 %v886
  %v1179 = vunpack.c.l.b16 %v887
  %v1180 = vunpack.c.h.b16 %v887
  %v1181 = vunpack.c.l.b16 %v888
  %v1182 = vunpack.c.h.b16 %v888
  %v1183 = vunpack.c.l.b16 %v889
  %v1184 = vunpack.c.h.b16 %v889
  %v1185 = vunpack.c.l.b16 %v890
  %v1186 = vunpack.c.h.b16 %v890
  %v1187 = vunpack.c.l.b16 %v891
  %v1188 = vunpack.c.h.b16 %v891
  %v1189 = vunpack.c.l.b16 %v892
  %v1190 = vunpack.c.h.b16 %v892
  %v1191 = vunpack.c.l.b16 %v893
  %v1192 = vunpack.c.h.b16 %v893
  %v1193 = vunpack.c.l.b16 %v894
  %v1194 = vunpack.c.h.b16 %v894
  %v1195 = vunpack.c.l.b16 %v895
  %v1196 = vunpack.c.h.b16 %v895
  %v1197 = vunpack.c.l.b16 %v896
  %v1198 = vunpack.c.h.b16 %v896
  %v1199 = vpack.c.b16 %v1145, %v1143
  %v1200 = vpack.c.b16 %v1146, %v1144
  %v1201 = vpack.c.b16 %v1149, %v1147
  %v1202 = vpack.c.b16 %v1150, %v1148
  %v1203 = vpack.c.b16 %v1153, %v1151
  %v1204 = vpack.c.b16 %v1154, %v1152
  %v1205 = vpack.c.b16 %v1157, %v1155
  %v1206 = vpack.c.b16 %v1158, %v1156
  %v1207 = vpack.c.b16 %v1161, %v1159
  %v1208 = vpack.c.b16 %v1162, %v1160
  %v1209 = vpack.c.b16 %v1165, %v1163
  %v1210 = vpack.c.b16 %v1166, %v1164
  %v1211 = vpack.c.b16 %v1169, %v1167
  %v1212 = vpack.c.b16 %v1170, %v1168
  %v1213 = vpack.c.b16 %v1173, %v1171
  %v1214 = vpack.c.b16 %v1174, %v1172
  %v1215 = vpack.c.b16 %v1177, %v1175
  %v1216 = vpack.c.b16 %v1178, %v1176
  %v1217 = vpack.c.b16 %v1181, %v1179
  %v1218 = vpack.c.b16 %v1182, %v1180
  %v1219 = vpack.c.b16 %v1185, %v1183
  %v1220 = vpack.c.b16 %v1186, %v1184
  %v1221 = vpack.c.b16 %v1189, %v1187
  %v1222 = vpack.c.b16 %v1190, %v1188
  %v1223 = vpack.c.b16 %v1193, %v1191
  %v1224 = vpack.c.b16 %v1194, %v1192
  %v1225 = vpack.c.b16 %v1197, %v1195
  %v1226 = vpack.c.b16 %v1198, %v1196
  %v1256 = vsel %vm1070, %v898, 0
  %1258 = vmatprep.subr.bf16.mxu0 %v1214
  %1259 = vmatpush1.bf16.msra.mxu0 %v1213
  %1260 = vmatprep.subr.bf16.mxu0 %v1212
  %1261 = vmatpush1.bf16.msra.mxu0 %v1211
  %1262 = vmatprep.subr.bf16.mxu0 %v1210
  %1263 = vmatpush1.bf16.msra.mxu0 %v1209
  %1264 = vmatprep.subr.bf16.mxu0 %v1208
  %1265 = vmatpush1.bf16.msra.mxu0 %v1207
  %1266 = vmatprep.subr.bf16.mxu0 %v1206
  %1267 = vmatpush1.bf16.msra.mxu0 %v1205
  %1268 = vmatprep.subr.bf16.mxu0 %v1204
  %1269 = vmatpush1.bf16.msra.mxu0 %v1203
  %1270 = vmatprep.subr.bf16.mxu0 %v1202
  %1271 = vmatpush1.bf16.msra.mxu0 %v1201
  %1272 = vmatprep.subr.bf16.mxu0 %v1200
  %1273 = vmatpush1.bf16.msra.mxu0 %v1199
  %1274 = vmatprep.subr.bf16.mxu0 0
  %1275 = vmatpush2.bf16.msra.mxu0 0
  %1276 = vmatprep.subr.bf16.mxu0 0
  %1277 = vmatpush2.bf16.msra.mxu0 0
  %1278 = vmatprep.subr.bf16.mxu0 %v1226
  %1279 = vmatpush2.bf16.msra.mxu0 %v1225
  %1280 = vmatprep.subr.bf16.mxu0 %v1224
  %1281 = vmatpush2.bf16.msra.mxu0 %v1223
  %1282 = vmatprep.subr.bf16.mxu0 %v1222
  %1283 = vmatpush2.bf16.msra.mxu0 %v1221
  %1284 = vmatprep.subr.bf16.mxu0 %v1220
  %1285 = vmatpush2.bf16.msra.mxu0 %v1219
  %1286 = vmatprep.subr.bf16.mxu0 %v1218
  %1287 = vmatpush2.bf16.msra.mxu0 %v1217
  %1288 = vmatprep.subr.bf16.mxu0 %v1216
  %1289 = vmatpush2.bf16.msra.mxu0 %v1215
  %1290 = vmatprep.mubr.bf16.mxu0 %v1256
  %1291 = vmatmul.mubr.bf16.gmra.mxu0 %v897
  %v1292 = vpop.f32.mrf.mxu0
  %v1293 = vadd.f32 %v1109, %v1292
  %v1294 = vpop.f32.mrf.mxu0
  %v1295 = vadd.f32 %v1111, %v1294
  %v1296 = vpop.f32.mrf.mxu0
  %v1297 = vpop.f32.mrf.mxu0
  %1298 = vdwg.mxu0
  %s1299 = scalar_lea.vmem %s5, 448
  %v1300 = vld [vmem:[%s1299] sm:$0xff]
  %v1301 = vld [vmem:[%s1299 + $0x8] sm:$0xff]
  %v1302 = vld [vmem:[%s1299 + $0x10] sm:$0xff]
  %v1303 = vld [vmem:[%s1299 + $0x18] sm:$0xff]
  %v1304 = vld [vmem:[%s1299 + $0x20] sm:$0xff]
  %v1305 = vld [vmem:[%s1299 + $0x28] sm:$0xff]
  %v1306 = vld [vmem:[%s1299 + $0x30] sm:$0xff]
  %v1307 = vld [vmem:[%s1299 + $0x38] sm:$0xff]
  %v1308 = vld [vmem:[%s1299 + $0x40] sm:$0xff]
  %v1309 = vld [vmem:[%s1299 + $0x48] sm:$0xff]
  %v1310 = vld [vmem:[%s1299 + $0x50] sm:$0xff]
  %v1311 = vld [vmem:[%s1299 + $0x58] sm:$0xff]
  %v1312 = vld [vmem:[%s1299 + $0x60] sm:$0xff]
  %v1313 = vld [vmem:[%s1299 + $0x68] sm:$0xff]
  %v1314 = vld [vmem:[%s1299 + $0x70] sm:$0xff]
  %v1315 = vld [vmem:[%s1299 + $0x78] sm:$0xff]
  %v1316 = vld [vmem:[%s1299 + $0x80] sm:$0xff]
  %v1317 = vld [vmem:[%s1299 + $0x88] sm:$0xff]
  %v1318 = vld [vmem:[%s1299 + $0x90] sm:$0xff]
  %v1319 = vld [vmem:[%s1299 + $0x98] sm:$0xff]
  %v1320 = vld [vmem:[%s1299 + $0xa0] sm:$0xff]
  %v1321 = vld [vmem:[%s1299 + $0xa8] sm:$0xff]
  %v1322 = vld [vmem:[%s1299 + $0xb0] sm:$0xff]
  %v1323 = vld [vmem:[%s1299 + $0xb8] sm:$0xff]
  %v1324 = vld [vmem:[%s1299 + $0xc0] sm:$0xff]
  %v1325 = vld [vmem:[%s1299 + $0xc8] sm:$0xff]
  %v1326 = vld [vmem:[%s1299 + $0xd0] sm:$0xff]
  %v1327 = vld [vmem:[%s1299 + $0xd8] sm:$0xff]
  %v1329 = vshrl.u32 %v897, 16
  %v1331 = vshll.u32 %v897, 16
  %v1333 = vrot.slane %v1331, 1
  %v1334 = vor.u32 %v1329, %v1333
  %v1335 = vshrl.u32 %v898, 16
  %v1337 = vshll.u32 %v898, 16
  %v1339 = vrot.slane %v1337, 1
  %v1340 = vor.u32 %v1335, %v1339
  %v1370 = vunpack.c.l.b16 %v1300
  %v1371 = vunpack.c.h.b16 %v1300
  %v1372 = vunpack.c.l.b16 %v1301
  %v1373 = vunpack.c.h.b16 %v1301
  %v1374 = vunpack.c.l.b16 %v1302
  %v1375 = vunpack.c.h.b16 %v1302
  %v1376 = vunpack.c.l.b16 %v1303
  %v1377 = vunpack.c.h.b16 %v1303
  %v1378 = vunpack.c.l.b16 %v1304
  %v1379 = vunpack.c.h.b16 %v1304
  %v1380 = vunpack.c.l.b16 %v1305
  %v1381 = vunpack.c.h.b16 %v1305
  %v1382 = vunpack.c.l.b16 %v1306
  %v1383 = vunpack.c.h.b16 %v1306
  %v1384 = vunpack.c.l.b16 %v1307
  %v1385 = vunpack.c.h.b16 %v1307
  %v1386 = vunpack.c.l.b16 %v1308
  %v1387 = vunpack.c.h.b16 %v1308
  %v1388 = vunpack.c.l.b16 %v1309
  %v1389 = vunpack.c.h.b16 %v1309
  %v1390 = vunpack.c.l.b16 %v1310
  %v1391 = vunpack.c.h.b16 %v1310
  %v1392 = vunpack.c.l.b16 %v1311
  %v1393 = vunpack.c.h.b16 %v1311
  %v1394 = vunpack.c.l.b16 %v1312
  %v1395 = vunpack.c.h.b16 %v1312
  %v1396 = vunpack.c.l.b16 %v1313
  %v1397 = vunpack.c.h.b16 %v1313
  %v1398 = vunpack.c.l.b16 %v1314
  %v1399 = vunpack.c.h.b16 %v1314
  %v1400 = vunpack.c.l.b16 %v1315
  %v1401 = vunpack.c.h.b16 %v1315
  %v1402 = vunpack.c.l.b16 %v1316
  %v1403 = vunpack.c.h.b16 %v1316
  %v1404 = vunpack.c.l.b16 %v1317
  %v1405 = vunpack.c.h.b16 %v1317
  %v1406 = vunpack.c.l.b16 %v1318
  %v1407 = vunpack.c.h.b16 %v1318
  %v1408 = vunpack.c.l.b16 %v1319
  %v1409 = vunpack.c.h.b16 %v1319
  %v1410 = vunpack.c.l.b16 %v1320
  %v1411 = vunpack.c.h.b16 %v1320
  %v1412 = vunpack.c.l.b16 %v1321
  %v1413 = vunpack.c.h.b16 %v1321
  %v1414 = vunpack.c.l.b16 %v1322
  %v1415 = vunpack.c.h.b16 %v1322
  %v1416 = vunpack.c.l.b16 %v1323
  %v1417 = vunpack.c.h.b16 %v1323
  %v1418 = vunpack.c.l.b16 %v1324
  %v1419 = vunpack.c.h.b16 %v1324
  %v1420 = vunpack.c.l.b16 %v1325
  %v1421 = vunpack.c.h.b16 %v1325
  %v1422 = vunpack.c.l.b16 %v1326
  %v1423 = vunpack.c.h.b16 %v1326
  %v1424 = vunpack.c.l.b16 %v1327
  %v1425 = vunpack.c.h.b16 %v1327
  %v1426 = vpack.c.b16 %v1372, %v1370
  %v1427 = vpack.c.b16 %v1373, %v1371
  %v1428 = vpack.c.b16 %v1376, %v1374
  %v1429 = vpack.c.b16 %v1377, %v1375
  %v1430 = vpack.c.b16 %v1380, %v1378
  %v1431 = vpack.c.b16 %v1381, %v1379
  %v1432 = vpack.c.b16 %v1384, %v1382
  %v1433 = vpack.c.b16 %v1385, %v1383
  %v1434 = vpack.c.b16 %v1388, %v1386
  %v1435 = vpack.c.b16 %v1389, %v1387
  %v1436 = vpack.c.b16 %v1392, %v1390
  %v1437 = vpack.c.b16 %v1393, %v1391
  %v1438 = vpack.c.b16 %v1396, %v1394
  %v1439 = vpack.c.b16 %v1397, %v1395
  %v1440 = vpack.c.b16 %v1400, %v1398
  %v1441 = vpack.c.b16 %v1401, %v1399
  %v1442 = vpack.c.b16 %v1404, %v1402
  %v1443 = vpack.c.b16 %v1405, %v1403
  %v1444 = vpack.c.b16 %v1408, %v1406
  %v1445 = vpack.c.b16 %v1409, %v1407
  %v1446 = vpack.c.b16 %v1412, %v1410
  %v1447 = vpack.c.b16 %v1413, %v1411
  %v1448 = vpack.c.b16 %v1416, %v1414
  %v1449 = vpack.c.b16 %v1417, %v1415
  %v1450 = vpack.c.b16 %v1420, %v1418
  %v1451 = vpack.c.b16 %v1421, %v1419
  %v1452 = vpack.c.b16 %v1424, %v1422
  %v1453 = vpack.c.b16 %v1425, %v1423
  %v1483 = vsel %vm1070, %v1340, 0
  %1485 = vmatprep.subr.bf16.mxu0 %v1441
  %1486 = vmatpush1.bf16.msra.mxu0 %v1440
  %1487 = vmatprep.subr.bf16.mxu0 %v1439
  %1488 = vmatpush1.bf16.msra.mxu0 %v1438
  %1489 = vmatprep.subr.bf16.mxu0 %v1437
  %1490 = vmatpush1.bf16.msra.mxu0 %v1436
  %1491 = vmatprep.subr.bf16.mxu0 %v1435
  %1492 = vmatpush1.bf16.msra.mxu0 %v1434
  %1493 = vmatprep.subr.bf16.mxu0 %v1433
  %1494 = vmatpush1.bf16.msra.mxu0 %v1432
  %1495 = vmatprep.subr.bf16.mxu0 %v1431
  %1496 = vmatpush1.bf16.msra.mxu0 %v1430
  %1497 = vmatprep.subr.bf16.mxu0 %v1429
  %1498 = vmatpush1.bf16.msra.mxu0 %v1428
  %1499 = vmatprep.subr.bf16.mxu0 %v1427
  %1500 = vmatpush1.bf16.msra.mxu0 %v1426
  %1501 = vmatprep.subr.bf16.mxu0 0
  %1502 = vmatpush2.bf16.msra.mxu0 0
  %1503 = vmatprep.subr.bf16.mxu0 0
  %1504 = vmatpush2.bf16.msra.mxu0 0
  %1505 = vmatprep.subr.bf16.mxu0 %v1453
  %1506 = vmatpush2.bf16.msra.mxu0 %v1452
  %1507 = vmatprep.subr.bf16.mxu0 %v1451
  %1508 = vmatpush2.bf16.msra.mxu0 %v1450
  %1509 = vmatprep.subr.bf16.mxu0 %v1449
  %1510 = vmatpush2.bf16.msra.mxu0 %v1448
  %1511 = vmatprep.subr.bf16.mxu0 %v1447
  %1512 = vmatpush2.bf16.msra.mxu0 %v1446
  %1513 = vmatprep.subr.bf16.mxu0 %v1445
  %1514 = vmatpush2.bf16.msra.mxu0 %v1444
  %1515 = vmatprep.subr.bf16.mxu0 %v1443
  %1516 = vmatpush2.bf16.msra.mxu0 %v1442
  %1517 = vmatprep.mubr.bf16.mxu0 %v1483
  %1518 = vmatmul.mubr.bf16.gmra.mxu0 %v1334
  %v1519 = vpop.f32.mrf.mxu0
  %v1520 = vadd.f32 0.0, %v1519
  %v1521 = vpop.f32.mrf.mxu0
  %v1522 = vadd.f32 0.0, %v1521
  %v1523 = vpop.f32.mrf.mxu0
  %v1524 = vpop.f32.mrf.mxu0
  %1525 = vdwg.mxu0
  %v1526 = vadd.f32 %v1293, %v1520
  %v1527 = vadd.f32 %v1295, %v1522
  %v1528 = vld [vmem:[%s6] sm:$0x3]
  %v1530 = vlaneseq
  %v1531 = vshrl.u32 %v1530, 7
  %v1532 = vsub.s32 0, %v1531
  %v1533 = vrot.slane %v1528, %v1532
  %v1534 = vlaneseq
  %v1535 = vshrl.u32 %v1534, 7
  %v1536 = vsub.s32 1, %v1535
  %v1537 = vrot.slane %v1528, %v1536
  %v1540 = vadd.f32 %v1526, %v1533
  %v1541 = vadd.f32 %v1527, %v1537
  %v1542 = vmax.f32 %v1540, 0.0
  %v1543 = vmax.f32 %v1541, 0.0
  %v1544 = vld [vmem:[%s7] sm:$0xf]
  %v1545 = vld [vmem:[%s7 + $0x4] sm:$0xf]
  %v1546 = vld [vmem:[%s7 + $0x8] sm:$0xf]
  %v1547 = vld [vmem:[%s7 + $0xc] sm:$0xf]
  %v1548 = vld [vmem:[%s7 + $0x10] sm:$0xf]
  %v1549 = vld [vmem:[%s7 + $0x14] sm:$0xf]
  %v1550 = vld [vmem:[%s7 + $0x18] sm:$0xf]
  %v1551 = vld [vmem:[%s7 + $0x1c] sm:$0xf]
  %v1552 = vld [vmem:[%s7 + $0x20] sm:$0xf]
  %v1553 = vld [vmem:[%s7 + $0x24] sm:$0xf]
  %v1554 = vld [vmem:[%s7 + $0x28] sm:$0xf]
  %v1555 = vld [vmem:[%s7 + $0x2c] sm:$0xf]
  %v1556 = vld [vmem:[%s7 + $0x30] sm:$0xf]
  %v1557 = vld [vmem:[%s7 + $0x34] sm:$0xf]
  %v1558 = vld [vmem:[%s7 + $0x38] sm:$0xf]
  %v1559 = vld [vmem:[%s7 + $0x3c] sm:$0xf]
  %v1560 = vld [vmem:[%s7 + $0x40] sm:$0xf]
  %v1561 = vld [vmem:[%s7 + $0x44] sm:$0xf]
  %v1562 = vld [vmem:[%s7 + $0x48] sm:$0xf]
  %v1563 = vld [vmem:[%s7 + $0x4c] sm:$0xf]
  %v1564 = vld [vmem:[%s7 + $0x50] sm:$0xf]
  %v1565 = vld [vmem:[%s7 + $0x54] sm:$0xf]
  %v1566 = vld [vmem:[%s7 + $0x58] sm:$0xf]
  %v1567 = vld [vmem:[%s7 + $0x5c] sm:$0xf]
  %v1568 = vpack.c.bf16 %v1542, %v1542
  %v1569 = vpack.c.bf16 %v1543, %v1543
  %s1570 = scalar_lea.vmem %s7, 96
  %v1571 = vld [vmem:[%s1570] sm:$0xf]
  %v1572 = vld [vmem:[%s1570 + $0x4] sm:$0xf]
  %v1573 = vld [vmem:[%s1570 + $0x8] sm:$0xf]
  %v1574 = vld [vmem:[%s1570 + $0xc] sm:$0xf]
  %v1575 = vld [vmem:[%s1570 + $0x10] sm:$0xf]
  %v1576 = vld [vmem:[%s1570 + $0x14] sm:$0xf]
  %v1577 = vld [vmem:[%s1570 + $0x18] sm:$0xf]
  %v1578 = vld [vmem:[%s1570 + $0x1c] sm:$0xf]
  %v1579 = vld [vmem:[%s1570 + $0x20] sm:$0xf]
  %v1580 = vld [vmem:[%s1570 + $0x24] sm:$0xf]
  %v1581 = vld [vmem:[%s1570 + $0x28] sm:$0xf]
  %v1582 = vld [vmem:[%s1570 + $0x2c] sm:$0xf]
  %v1583 = vld [vmem:[%s1570 + $0x30] sm:$0xf]
  %v1584 = vld [vmem:[%s1570 + $0x34] sm:$0xf]
  %v1585 = vld [vmem:[%s1570 + $0x38] sm:$0xf]
  %v1586 = vld [vmem:[%s1570 + $0x3c] sm:$0xf]
  %v1587 = vld [vmem:[%s1570 + $0x40] sm:$0xf]
  %v1588 = vld [vmem:[%s1570 + $0x44] sm:$0xf]
  %v1589 = vld [vmem:[%s1570 + $0x48] sm:$0xf]
  %v1590 = vld [vmem:[%s1570 + $0x4c] sm:$0xf]
  %v1591 = vld [vmem:[%s1570 + $0x50] sm:$0xf]
  %v1592 = vld [vmem:[%s1570 + $0x54] sm:$0xf]
  %v1593 = vld [vmem:[%s1570 + $0x58] sm:$0xf]
  %v1594 = vld [vmem:[%s1570 + $0x5c] sm:$0xf]
  %v1596 = vshrl.u32 %v1568, 16
  %v1599 = vshrl.u32 %v1569, 16
  %v1626 = vunpack.c.l.b16 %v1571
  %v1627 = vunpack.c.l.b16 %v1572
  %v1628 = vunpack.c.l.b16 %v1573
  %v1629 = vunpack.c.l.b16 %v1574
  %v1630 = vunpack.c.l.b16 %v1575
  %v1631 = vunpack.c.l.b16 %v1576
  %v1632 = vunpack.c.l.b16 %v1577
  %v1633 = vunpack.c.l.b16 %v1578
  %v1634 = vunpack.c.l.b16 %v1579
  %v1635 = vunpack.c.l.b16 %v1580
  %v1636 = vunpack.c.l.b16 %v1581
  %v1637 = vunpack.c.l.b16 %v1582
  %v1638 = vunpack.c.l.b16 %v1583
  %v1639 = vunpack.c.l.b16 %v1584
  %v1640 = vunpack.c.l.b16 %v1585
  %v1641 = vunpack.c.l.b16 %v1586
  %v1642 = vunpack.c.l.b16 %v1587
  %v1643 = vunpack.c.l.b16 %v1588
  %v1644 = vunpack.c.l.b16 %v1589
  %v1645 = vunpack.c.l.b16 %v1590
  %v1646 = vunpack.c.l.b16 %v1591
  %v1647 = vunpack.c.l.b16 %v1592
  %v1648 = vunpack.c.l.b16 %v1593
  %v1649 = vunpack.c.l.b16 %v1594
  %v1650 = vpack.c.b16 %v1627, %v1626
  %v1651 = vpack.c.b16 %v1629, %v1628
  %v1652 = vpack.c.b16 %v1631, %v1630
  %v1653 = vpack.c.b16 %v1633, %v1632
  %v1654 = vpack.c.b16 %v1635, %v1634
  %v1655 = vpack.c.b16 %v1637, %v1636
  %v1656 = vpack.c.b16 %v1639, %v1638
  %v1657 = vpack.c.b16 %v1641, %v1640
  %v1658 = vpack.c.b16 %v1643, %v1642
  %v1659 = vpack.c.b16 %v1645, %v1644
  %v1660 = vpack.c.b16 %v1647, %v1646
  %v1661 = vpack.c.b16 %v1649, %v1648
  %v1675 = vsel %vm245, %v1599, 0
  %1677 = vmatprep.subr.bf16.mxu0 0
  %1678 = vmatpush1.bf16.msra.mxu0 %v1657
  %1679 = vmatprep.subr.bf16.mxu0 0
  %1680 = vmatpush1.bf16.msra.mxu0 %v1656
  %1681 = vmatprep.subr.bf16.mxu0 0
  %1682 = vmatpush1.bf16.msra.mxu0 %v1655
  %1683 = vmatprep.subr.bf16.mxu0 0
  %1684 = vmatpush1.bf16.msra.mxu0 %v1654
  %1685 = vmatprep.subr.bf16.mxu0 0
  %1686 = vmatpush1.bf16.msra.mxu0 %v1653
  %1687 = vmatprep.subr.bf16.mxu0 0
  %1688 = vmatpush1.bf16.msra.mxu0 %v1652
  %1689 = vmatprep.subr.bf16.mxu0 0
  %1690 = vmatpush1.bf16.msra.mxu0 %v1651
  %1691 = vmatprep.subr.bf16.mxu0 0
  %1692 = vmatpush1.bf16.msra.mxu0 %v1650
  %1693 = vmatprep.subr.bf16.mxu0 0
  %1694 = vmatpush2.bf16.msra.mxu0 0
  %1695 = vmatprep.subr.bf16.mxu0 0
  %1696 = vmatpush2.bf16.msra.mxu0 0
  %1697 = vmatprep.subr.bf16.mxu0 0
  %1698 = vmatpush2.bf16.msra.mxu0 0
  %1699 = vmatprep.subr.bf16.mxu0 0
  %1700 = vmatpush2.bf16.msra.mxu0 0
  %1701 = vmatprep.subr.bf16.mxu0 0
  %1702 = vmatpush2.bf16.msra.mxu0 %v1661
  %1703 = vmatprep.subr.bf16.mxu0 0
  %1704 = vmatpush2.bf16.msra.mxu0 %v1660
  %1705 = vmatprep.subr.bf16.mxu0 0
  %1706 = vmatpush2.bf16.msra.mxu0 %v1659
  %1707 = vmatprep.subr.bf16.mxu0 0
  %1708 = vmatpush2.bf16.msra.mxu0 %v1658
  %1709 = vmatprep.mubr.bf16.mxu0 %v1675
  %1710 = vmatmul.mubr.bf16.gmra.mxu0 %v1596
  %v1711 = vpop.f32.mrf.mxu0
  %v1712 = vadd.f32 0.0, %v1711
  %v1713 = vpop.f32.mrf.mxu0
  %v1714 = vpop.f32.mrf.mxu0
  %v1715 = vpop.f32.mrf.mxu0
  %1716 = vdwg.mxu0
  %v1741 = vunpack.c.l.b16 %v1544
  %v1742 = vunpack.c.l.b16 %v1545
  %v1743 = vunpack.c.l.b16 %v1546
  %v1744 = vunpack.c.l.b16 %v1547
  %v1745 = vunpack.c.l.b16 %v1548
  %v1746 = vunpack.c.l.b16 %v1549
  %v1747 = vunpack.c.l.b16 %v1550
  %v1748 = vunpack.c.l.b16 %v1551
  %v1749 = vunpack.c.l.b16 %v1552
  %v1750 = vunpack.c.l.b16 %v1553
  %v1751 = vunpack.c.l.b16 %v1554
  %v1752 = vunpack.c.l.b16 %v1555
  %v1753 = vunpack.c.l.b16 %v1556
  %v1754 = vunpack.c.l.b16 %v1557
  %v1755 = vunpack.c.l.b16 %v1558
  %v1756 = vunpack.c.l.b16 %v1559
  %v1757 = vunpack.c.l.b16 %v1560
  %v1758 = vunpack.c.l.b16 %v1561
  %v1759 = vunpack.c.l.b16 %v1562
  %v1760 = vunpack.c.l.b16 %v1563
  %v1761 = vunpack.c.l.b16 %v1564
  %v1762 = vunpack.c.l.b16 %v1565
  %v1763 = vunpack.c.l.b16 %v1566
  %v1764 = vunpack.c.l.b16 %v1567
  %v1765 = vpack.c.b16 %v1742, %v1741
  %v1766 = vpack.c.b16 %v1744, %v1743
  %v1767 = vpack.c.b16 %v1746, %v1745
  %v1768 = vpack.c.b16 %v1748, %v1747
  %v1769 = vpack.c.b16 %v1750, %v1749
  %v1770 = vpack.c.b16 %v1752, %v1751
  %v1771 = vpack.c.b16 %v1754, %v1753
  %v1772 = vpack.c.b16 %v1756, %v1755
  %v1773 = vpack.c.b16 %v1758, %v1757
  %v1774 = vpack.c.b16 %v1760, %v1759
  %v1775 = vpack.c.b16 %v1762, %v1761
  %v1776 = vpack.c.b16 %v1764, %v1763
  %v1789 = vsel %vm245, %v1569, 0
  %1791 = vmatprep.subr.bf16.mxu0 0
  %1792 = vmatpush1.bf16.msra.mxu0 %v1772
  %1793 = vmatprep.subr.bf16.mxu0 0
  %1794 = vmatpush1.bf16.msra.mxu0 %v1771
  %1795 = vmatprep.subr.bf16.mxu0 0
  %1796 = vmatpush1.bf16.msra.mxu0 %v1770
  %1797 = vmatprep.subr.bf16.mxu0 0
  %1798 = vmatpush1.bf16.msra.mxu0 %v1769
  %1799 = vmatprep.subr.bf16.mxu0 0
  %1800 = vmatpush1.bf16.msra.mxu0 %v1768
  %1801 = vmatprep.subr.bf16.mxu0 0
  %1802 = vmatpush1.bf16.msra.mxu0 %v1767
  %1803 = vmatprep.subr.bf16.mxu0 0
  %1804 = vmatpush1.bf16.msra.mxu0 %v1766
  %1805 = vmatprep.subr.bf16.mxu0 0
  %1806 = vmatpush1.bf16.msra.mxu0 %v1765
  %1807 = vmatprep.subr.bf16.mxu0 0
  %1808 = vmatpush2.bf16.msra.mxu0 0
  %1809 = vmatprep.subr.bf16.mxu0 0
  %1810 = vmatpush2.bf16.msra.mxu0 0
  %1811 = vmatprep.subr.bf16.mxu0 0
  %1812 = vmatpush2.bf16.msra.mxu0 0
  %1813 = vmatprep.subr.bf16.mxu0 0
  %1814 = vmatpush2.bf16.msra.mxu0 0
  %1815 = vmatprep.subr.bf16.mxu0 0
  %1816 = vmatpush2.bf16.msra.mxu0 %v1776
  %1817 = vmatprep.subr.bf16.mxu0 0
  %1818 = vmatpush2.bf16.msra.mxu0 %v1775
  %1819 = vmatprep.subr.bf16.mxu0 0
  %1820 = vmatpush2.bf16.msra.mxu0 %v1774
  %1821 = vmatprep.subr.bf16.mxu0 0
  %1822 = vmatpush2.bf16.msra.mxu0 %v1773
  %1823 = vmatprep.mubr.bf16.mxu0 %v1789
  %1824 = vmatmul.mubr.bf16.gmra.mxu0 %v1568
  %v1825 = vpop.f32.mrf.mxu0
  %v1826 = vadd.f32 %v1712, %v1825
  %v1827 = vpop.f32.mrf.mxu0
  %v1828 = vpop.f32.mrf.mxu0
  %v1829 = vpop.f32.mrf.mxu0
  %1830 = vdwg.mxu0
  %s1831 = scalar_lea.vmem %s7, 192
  %v1832 = vld [vmem:[%s1831] sm:$0xf]
  %v1833 = vld [vmem:[%s1831 + $0x4] sm:$0xf]
  %v1834 = vld [vmem:[%s1831 + $0x8] sm:$0xf]
  %v1835 = vld [vmem:[%s1831 + $0xc] sm:$0xf]
  %v1836 = vld [vmem:[%s1831 + $0x10] sm:$0xf]
  %v1837 = vld [vmem:[%s1831 + $0x14] sm:$0xf]
  %v1838 = vld [vmem:[%s1831 + $0x18] sm:$0xf]
  %v1839 = vld [vmem:[%s1831 + $0x1c] sm:$0xf]
  %v1840 = vld [vmem:[%s1831 + $0x20] sm:$0xf]
  %v1841 = vld [vmem:[%s1831 + $0x24] sm:$0xf]
  %v1842 = vld [vmem:[%s1831 + $0x28] sm:$0xf]
  %v1843 = vld [vmem:[%s1831 + $0x2c] sm:$0xf]
  %v1844 = vld [vmem:[%s1831 + $0x30] sm:$0xf]
  %v1845 = vld [vmem:[%s1831 + $0x34] sm:$0xf]
  %v1846 = vld [vmem:[%s1831 + $0x38] sm:$0xf]
  %v1847 = vld [vmem:[%s1831 + $0x3c] sm:$0xf]
  %v1848 = vld [vmem:[%s1831 + $0x40] sm:$0xf]
  %v1849 = vld [vmem:[%s1831 + $0x44] sm:$0xf]
  %v1850 = vld [vmem:[%s1831 + $0x48] sm:$0xf]
  %v1851 = vld [vmem:[%s1831 + $0x4c] sm:$0xf]
  %v1852 = vld [vmem:[%s1831 + $0x50] sm:$0xf]
  %v1853 = vld [vmem:[%s1831 + $0x54] sm:$0xf]
  %v1854 = vld [vmem:[%s1831 + $0x58] sm:$0xf]
  %v1855 = vld [vmem:[%s1831 + $0x5c] sm:$0xf]
  %v1858 = vrot.slane %v1568, 1
  %v1859 = vrot.slane %v1569, 1
  %v1885 = vunpack.c.l.b16 %v1832
  %v1886 = vunpack.c.l.b16 %v1833
  %v1887 = vunpack.c.l.b16 %v1834
  %v1888 = vunpack.c.l.b16 %v1835
  %v1889 = vunpack.c.l.b16 %v1836
  %v1890 = vunpack.c.l.b16 %v1837
  %v1891 = vunpack.c.l.b16 %v1838
  %v1892 = vunpack.c.l.b16 %v1839
  %v1893 = vunpack.c.l.b16 %v1840
  %v1894 = vunpack.c.l.b16 %v1841
  %v1895 = vunpack.c.l.b16 %v1842
  %v1896 = vunpack.c.l.b16 %v1843
  %v1897 = vunpack.c.l.b16 %v1844
  %v1898 = vunpack.c.l.b16 %v1845
  %v1899 = vunpack.c.l.b16 %v1846
  %v1900 = vunpack.c.l.b16 %v1847
  %v1901 = vunpack.c.l.b16 %v1848
  %v1902 = vunpack.c.l.b16 %v1849
  %v1903 = vunpack.c.l.b16 %v1850
  %v1904 = vunpack.c.l.b16 %v1851
  %v1905 = vunpack.c.l.b16 %v1852
  %v1906 = vunpack.c.l.b16 %v1853
  %v1907 = vunpack.c.l.b16 %v1854
  %v1908 = vunpack.c.l.b16 %v1855
  %v1909 = vpack.c.b16 %v1886, %v1885
  %v1910 = vpack.c.b16 %v1888, %v1887
  %v1911 = vpack.c.b16 %v1890, %v1889
  %v1912 = vpack.c.b16 %v1892, %v1891
  %v1913 = vpack.c.b16 %v1894, %v1893
  %v1914 = vpack.c.b16 %v1896, %v1895
  %v1915 = vpack.c.b16 %v1898, %v1897
  %v1916 = vpack.c.b16 %v1900, %v1899
  %v1917 = vpack.c.b16 %v1902, %v1901
  %v1918 = vpack.c.b16 %v1904, %v1903
  %v1919 = vpack.c.b16 %v1906, %v1905
  %v1920 = vpack.c.b16 %v1908, %v1907
  %v1934 = vsel %vm245, %v1859, 0
  %1936 = vmatprep.subr.bf16.mxu0 0
  %1937 = vmatpush1.bf16.msra.mxu0 %v1916
  %1938 = vmatprep.subr.bf16.mxu0 0
  %1939 = vmatpush1.bf16.msra.mxu0 %v1915
  %1940 = vmatprep.subr.bf16.mxu0 0
  %1941 = vmatpush1.bf16.msra.mxu0 %v1914
  %1942 = vmatprep.subr.bf16.mxu0 0
  %1943 = vmatpush1.bf16.msra.mxu0 %v1913
  %1944 = vmatprep.subr.bf16.mxu0 0
  %1945 = vmatpush1.bf16.msra.mxu0 %v1912
  %1946 = vmatprep.subr.bf16.mxu0 0
  %1947 = vmatpush1.bf16.msra.mxu0 %v1911
  %1948 = vmatprep.subr.bf16.mxu0 0
  %1949 = vmatpush1.bf16.msra.mxu0 %v1910
  %1950 = vmatprep.subr.bf16.mxu0 0
  %1951 = vmatpush1.bf16.msra.mxu0 %v1909
  %1952 = vmatprep.subr.bf16.mxu0 0
  %1953 = vmatpush2.bf16.msra.mxu0 0
  %1954 = vmatprep.subr.bf16.mxu0 0
  %1955 = vmatpush2.bf16.msra.mxu0 0
  %1956 = vmatprep.subr.bf16.mxu0 0
  %1957 = vmatpush2.bf16.msra.mxu0 0
  %1958 = vmatprep.subr.bf16.mxu0 0
  %1959 = vmatpush2.bf16.msra.mxu0 0
  %1960 = vmatprep.subr.bf16.mxu0 0
  %1961 = vmatpush2.bf16.msra.mxu0 %v1920
  %1962 = vmatprep.subr.bf16.mxu0 0
  %1963 = vmatpush2.bf16.msra.mxu0 %v1919
  %1964 = vmatprep.subr.bf16.mxu0 0
  %1965 = vmatpush2.bf16.msra.mxu0 %v1918
  %1966 = vmatprep.subr.bf16.mxu0 0
  %1967 = vmatpush2.bf16.msra.mxu0 %v1917
  %1968 = vmatprep.mubr.bf16.mxu0 %v1934
  %1969 = vmatmul.mubr.bf16.gmra.mxu0 %v1858
  %v1970 = vpop.f32.mrf.mxu0
  %v1971 = vadd.f32 0.0, %v1970
  %v1972 = vpop.f32.mrf.mxu0
  %v1973 = vpop.f32.mrf.mxu0
  %v1974 = vpop.f32.mrf.mxu0
  %1975 = vdwg.mxu0
  %v1976 = vadd.f32 %v1826, %v1971
  %v1977 = vld [vmem:[%s8] sm:$0x1]
  %v1978 = vadd.f32 %v1976, %v1977
  %v1979 = vld [vmem:[%s9] sm:$0xf]
  %v1980 = vld [vmem:[%s9 + $0x4] sm:$0xf]
  %v1981 = vld [vmem:[%s9 + $0x8] sm:$0xf]
  %v1982 = vld [vmem:[%s9 + $0xc] sm:$0xf]
  %v1983 = vld [vmem:[%s9 + $0x10] sm:$0xf]
  %v1984 = vld [vmem:[%s9 + $0x14] sm:$0xf]
  %v1985 = vld [vmem:[%s9 + $0x18] sm:$0xf]
  %v1986 = vld [vmem:[%s9 + $0x1c] sm:$0xf]
  %v1987 = vpack.c.bf16 %v1978, %v1978
  %v1988 = vld [vmem:[%s1] sm:$0x1]
  %v1989 = vld [vmem:[%s10] sm:$0xf]
  %v1990 = vld [vmem:[%s10 + $0x4] sm:$0x7]
  %v1991 = vpack.c.bf16 %v1988, %v1988
  %v1994 = vunpack.c.l.b16 %v1989
  %v1995 = vunpack.c.l.b16 %v1990
  %v1996 = vpack.c.b16 %v1995, %v1994
  %vm1997 = vcmask 113664
  %v1999 = vsel %vm1997, %v1991, 0
  %vm2001 = vcmask 1046528
  %v2003 = vsel %vm2001, %v1996, 0
  %2005 = vmatprep.subr.bf16.mxu0 0
  %2006 = vmatpush1.bf16.msra.mxu0 0
  %2007 = vmatprep.subr.bf16.mxu0 0
  %2008 = vmatpush1.bf16.msra.mxu0 0
  %2009 = vmatprep.subr.bf16.mxu0 0
  %2010 = vmatpush1.bf16.msra.mxu0 0
  %2011 = vmatprep.subr.bf16.mxu0 0
  %2012 = vmatpush1.bf16.msra.mxu0 0
  %2013 = vmatprep.subr.bf16.mxu0 0
  %2014 = vmatpush1.bf16.msra.mxu0 0
  %2015 = vmatprep.subr.bf16.mxu0 0
  %2016 = vmatpush1.bf16.msra.mxu0 0
  %2017 = vmatprep.subr.bf16.mxu0 0
  %2018 = vmatpush1.bf16.msra.mxu0 0
  %2019 = vmatprep.subr.bf16.mxu0 0
  %2020 = vmatpush1.bf16.msra.mxu0 %v2003
  %2021 = vmatprep.subr.bf16.mxu0 0
  %2022 = vmatpush2.bf16.msra.mxu0 0
  %2023 = vmatprep.subr.bf16.mxu0 0
  %2024 = vmatpush2.bf16.msra.mxu0 0
  %2025 = vmatprep.subr.bf16.mxu0 0
  %2026 = vmatpush2.bf16.msra.mxu0 0
  %2027 = vmatprep.subr.bf16.mxu0 0
  %2028 = vmatpush2.bf16.msra.mxu0 0
  %2029 = vmatprep.subr.bf16.mxu0 0
  %2030 = vmatpush2.bf16.msra.mxu0 0
  %2031 = vmatprep.subr.bf16.mxu0 0
  %2032 = vmatpush2.bf16.msra.mxu0 0
  %2033 = vmatprep.subr.bf16.mxu0 0
  %2034 = vmatpush2.bf16.msra.mxu0 0
  %2035 = vmatprep.subr.bf16.mxu0 0
  %2036 = vmatpush2.bf16.msra.mxu0 0
  %2037 = vmatprep.mubr.bf16.mxu0 0
  %2038 = vmatmul.mubr.bf16.gmra.mxu0 %v1999
  %v2039 = vpop.f32.mrf.mxu0
  %v2040 = vadd.f32 0.0, %v2039
  %v2041 = vpop.f32.mrf.mxu0
  %v2042 = vpop.f32.mrf.mxu0
  %v2043 = vpop.f32.mrf.mxu0
  %2044 = vdwg.mxu0
  %v2053 = vunpack.c.l.b16 %v1979
  %v2054 = vunpack.c.l.b16 %v1980
  %v2055 = vunpack.c.l.b16 %v1981
  %v2056 = vunpack.c.l.b16 %v1982
  %v2057 = vunpack.c.l.b16 %v1983
  %v2058 = vunpack.c.l.b16 %v1984
  %v2059 = vunpack.c.l.b16 %v1985
  %v2060 = vunpack.c.l.b16 %v1986
  %v2061 = vpack.c.b16 %v2054, %v2053
  %v2062 = vpack.c.b16 %v2056, %v2055
  %v2063 = vpack.c.b16 %v2058, %v2057
  %v2064 = vpack.c.b16 %v2060, %v2059
  %v2070 = vsel %vm245, %v1987, 0
  %2072 = vmatprep.subr.bf16.mxu0 0
  %2073 = vmatpush1.bf16.msra.mxu0 0
  %2074 = vmatprep.subr.bf16.mxu0 0
  %2075 = vmatpush1.bf16.msra.mxu0 0
  %2076 = vmatprep.subr.bf16.mxu0 0
  %2077 = vmatpush1.bf16.msra.mxu0 0
  %2078 = vmatprep.subr.bf16.mxu0 0
  %2079 = vmatpush1.bf16.msra.mxu0 0
  %2080 = vmatprep.subr.bf16.mxu0 0
  %2081 = vmatpush1.bf16.msra.mxu0 %v2064
  %2082 = vmatprep.subr.bf16.mxu0 0
  %2083 = vmatpush1.bf16.msra.mxu0 %v2063
  %2084 = vmatprep.subr.bf16.mxu0 0
  %2085 = vmatpush1.bf16.msra.mxu0 %v2062
  %2086 = vmatprep.subr.bf16.mxu0 0
  %2087 = vmatpush1.bf16.msra.mxu0 %v2061
  %2088 = vmatprep.subr.bf16.mxu0 0
  %2089 = vmatpush2.bf16.msra.mxu0 0
  %2090 = vmatprep.subr.bf16.mxu0 0
  %2091 = vmatpush2.bf16.msra.mxu0 0
  %2092 = vmatprep.subr.bf16.mxu0 0
  %2093 = vmatpush2.bf16.msra.mxu0 0
  %2094 = vmatprep.subr.bf16.mxu0 0
  %2095 = vmatpush2.bf16.msra.mxu0 0
  %2096 = vmatprep.subr.bf16.mxu0 0
  %2097 = vmatpush2.bf16.msra.mxu0 0
  %2098 = vmatprep.subr.bf16.mxu0 0
  %2099 = vmatpush2.bf16.msra.mxu0 0
  %2100 = vmatprep.subr.bf16.mxu0 0
  %2101 = vmatpush2.bf16.msra.mxu0 0
  %2102 = vmatprep.subr.bf16.mxu0 0
  %2103 = vmatpush2.bf16.msra.mxu0 0
  %2104 = vmatprep.mubr.bf16.mxu0 0
  %2105 = vmatmul.mubr.bf16.gmra.mxu0 %v2070
  %v2106 = vpop.f32.mrf.mxu0
  %v2107 = vadd.f32 %v2040, %v2106
  %v2108 = vpop.f32.mrf.mxu0
  %v2109 = vpop.f32.mrf.mxu0
  %v2110 = vpop.f32.mrf.mxu0
  %2111 = vdwg.mxu0
  %v2112 = vld [vmem:[%s11] sm:$0x1]
  %v2113 = vadd.f32 %v2107, %v2112
  %vm2114 = vcmp.gt.f32.partialorder %v2113, 0.0
  %v2115 = vmul.f32 %v2113, 1.442695
  %v2116 = vpow.pop %v2115
  %v2117 = vsub.f32 %v2116, 1.0
  %v2118 = vsel %vm2114, %v2113, %v2117
  %v2119 = vld [vmem:[%s12] sm:$0xf]
  %v2120 = vld [vmem:[%s12 + $0x4] sm:$0xf]
  %v2121 = vld [vmem:[%s12 + $0x8] sm:$0xf]
  %v2122 = vld [vmem:[%s12 + $0xc] sm:$0xf]
  %v2123 = vld [vmem:[%s12 + $0x10] sm:$0xf]
  %v2124 = vld [vmem:[%s12 + $0x14] sm:$0xf]
  %v2125 = vld [vmem:[%s12 + $0x18] sm:$0xf]
  %v2126 = vld [vmem:[%s12 + $0x1c] sm:$0xf]
  %v2127 = vpack.c.bf16 %v2118, %v2118
  %v2128 = vld [vmem:[%s2] sm:$0x1]
  %v2129 = vld [vmem:[%s13] sm:$0x7]
  %v2130 = vpack.c.bf16 %v2128, %v2128
  %vm2131 = vcmask 48128
  %v2133 = vsel %vm2131, %v2130, 0
  %vm2135 = vcmask 1042432
  %v2137 = vsel %vm2135, %v2129, 0
  %2139 = vmatprep.subr.bf16.mxu0 0
  %2140 = vmatpush1.bf16.msra.mxu0 0
  %2141 = vmatprep.subr.bf16.mxu0 0
  %2142 = vmatpush1.bf16.msra.mxu0 0
  %2143 = vmatprep.subr.bf16.mxu0 0
  %2144 = vmatpush1.bf16.msra.mxu0 0
  %2145 = vmatprep.subr.bf16.mxu0 0
  %2146 = vmatpush1.bf16.msra.mxu0 0
  %2147 = vmatprep.subr.bf16.mxu0 0
  %2148 = vmatpush1.bf16.msra.mxu0 0
  %2149 = vmatprep.subr.bf16.mxu0 0
  %2150 = vmatpush1.bf16.msra.mxu0 0
  %2151 = vmatprep.subr.bf16.mxu0 0
  %2152 = vmatpush1.bf16.msra.mxu0 0
  %2153 = vmatprep.subr.bf16.mxu0 0
  %2154 = vmatpush1.bf16.msra.mxu0 %v2137
  %2155 = vmatprep.subr.bf16.mxu0 0
  %2156 = vmatpush2.bf16.msra.mxu0 0
  %2157 = vmatprep.subr.bf16.mxu0 0
  %2158 = vmatpush2.bf16.msra.mxu0 0
  %2159 = vmatprep.subr.bf16.mxu0 0
  %2160 = vmatpush2.bf16.msra.mxu0 0
  %2161 = vmatprep.subr.bf16.mxu0 0
  %2162 = vmatpush2.bf16.msra.mxu0 0
  %2163 = vmatprep.subr.bf16.mxu0 0
  %2164 = vmatpush2.bf16.msra.mxu0 0
  %2165 = vmatprep.subr.bf16.mxu0 0
  %2166 = vmatpush2.bf16.msra.mxu0 0
  %2167 = vmatprep.subr.bf16.mxu0 0
  %2168 = vmatpush2.bf16.msra.mxu0 0
  %2169 = vmatprep.subr.bf16.mxu0 0
  %2170 = vmatpush2.bf16.msra.mxu0 0
  %2171 = vmatprep.mubr.bf16.mxu0 0
  %2172 = vmatmul.mubr.bf16.gmra.mxu0 %v2133
  %v2173 = vpop.f32.mrf.mxu0
  %v2174 = vadd.f32 0.0, %v2173
  %v2175 = vpop.f32.mrf.mxu0
  %v2176 = vpop.f32.mrf.mxu0
  %v2177 = vpop.f32.mrf.mxu0
  %2178 = vdwg.mxu0
  %v2187 = vunpack.c.l.b16 %v2119
  %v2188 = vunpack.c.l.b16 %v2120
  %v2189 = vunpack.c.l.b16 %v2121
  %v2190 = vunpack.c.l.b16 %v2122
  %v2191 = vunpack.c.l.b16 %v2123
  %v2192 = vunpack.c.l.b16 %v2124
  %v2193 = vunpack.c.l.b16 %v2125
  %v2194 = vunpack.c.l.b16 %v2126
  %v2195 = vpack.c.b16 %v2188, %v2187
  %v2196 = vpack.c.b16 %v2190, %v2189
  %v2197 = vpack.c.b16 %v2192, %v2191
  %v2198 = vpack.c.b16 %v2194, %v2193
  %v2204 = vsel %vm245, %v2127, 0
  %2206 = vmatprep.subr.bf16.mxu0 0
  %2207 = vmatpush1.bf16.msra.mxu0 0
  %2208 = vmatprep.subr.bf16.mxu0 0
  %2209 = vmatpush1.bf16.msra.mxu0 0
  %2210 = vmatprep.subr.bf16.mxu0 0
  %2211 = vmatpush1.bf16.msra.mxu0 0
  %2212 = vmatprep.subr.bf16.mxu0 0
  %2213 = vmatpush1.bf16.msra.mxu0 0
  %2214 = vmatprep.subr.bf16.mxu0 0
  %2215 = vmatpush1.bf16.msra.mxu0 %v2198
  %2216 = vmatprep.subr.bf16.mxu0 0
  %2217 = vmatpush1.bf16.msra.mxu0 %v2197
  %2218 = vmatprep.subr.bf16.mxu0 0
  %2219 = vmatpush1.bf16.msra.mxu0 %v2196
  %2220 = vmatprep.subr.bf16.mxu0 0
  %2221 = vmatpush1.bf16.msra.mxu0 %v2195
  %2222 = vmatprep.subr.bf16.mxu0 0
  %2223 = vmatpush2.bf16.msra.mxu0 0
  %2224 = vmatprep.subr.bf16.mxu0 0
  %2225 = vmatpush2.bf16.msra.mxu0 0
  %2226 = vmatprep.subr.bf16.mxu0 0
  %2227 = vmatpush2.bf16.msra.mxu0 0
  %2228 = vmatprep.subr.bf16.mxu0 0
  %2229 = vmatpush2.bf16.msra.mxu0 0
  %2230 = vmatprep.subr.bf16.mxu0 0
  %2231 = vmatpush2.bf16.msra.mxu0 0
  %2232 = vmatprep.subr.bf16.mxu0 0
  %2233 = vmatpush2.bf16.msra.mxu0 0
  %2234 = vmatprep.subr.bf16.mxu0 0
  %2235 = vmatpush2.bf16.msra.mxu0 0
  %2236 = vmatprep.subr.bf16.mxu0 0
  %2237 = vmatpush2.bf16.msra.mxu0 0
  %2238 = vmatprep.mubr.bf16.mxu0 0
  %2239 = vmatmul.mubr.bf16.gmra.mxu0 %v2204
  %v2240 = vpop.f32.mrf.mxu0
  %v2241 = vadd.f32 %v2174, %v2240
  %v2242 = vpop.f32.mrf.mxu0
  %v2243 = vpop.f32.mrf.mxu0
  %v2244 = vpop.f32.mrf.mxu0
  %2245 = vdwg.mxu0
  %v2246 = vld [vmem:[%s14] sm:$0x1]
  %v2247 = vadd.f32 %v2241, %v2246
  %vm2248 = vcmp.gt.f32.partialorder %v2247, 0.0
  %v2249 = vmul.f32 %v2247, 1.442695
  %v2250 = vpow.pop %v2249
  %v2251 = vsub.f32 %v2250, 1.0
  %v2252 = vsel %vm2248, %v2247, %v2251
  %v2253 = vld [vmem:[%s15] sm:$0xf]
  %v2254 = vld [vmem:[%s15 + $0x4] sm:$0xf]
  %v2255 = vld [vmem:[%s15 + $0x8] sm:$0xf]
  %v2256 = vld [vmem:[%s15 + $0xc] sm:$0xf]
  %v2257 = vld [vmem:[%s15 + $0x10] sm:$0xf]
  %v2258 = vld [vmem:[%s15 + $0x14] sm:$0xf]
  %v2259 = vld [vmem:[%s15 + $0x18] sm:$0xf]
  %v2260 = vld [vmem:[%s15 + $0x1c] sm:$0xf]
  %v2261 = vpack.c.bf16 %v2252, %v2252
  %v2262 = vld [vmem:[%s16] sm:$0x1]
  %v2271 = vunpack.c.l.b16 %v2253
  %v2272 = vunpack.c.l.b16 %v2254
  %v2273 = vunpack.c.l.b16 %v2255
  %v2274 = vunpack.c.l.b16 %v2256
  %v2275 = vunpack.c.l.b16 %v2257
  %v2276 = vunpack.c.l.b16 %v2258
  %v2277 = vunpack.c.l.b16 %v2259
  %v2278 = vunpack.c.l.b16 %v2260
  %v2279 = vpack.c.b16 %v2272, %v2271
  %v2280 = vpack.c.b16 %v2274, %v2273
  %v2281 = vpack.c.b16 %v2276, %v2275
  %v2282 = vpack.c.b16 %v2278, %v2277
  %v2288 = vsel %vm245, %v2261, 0
  %2290 = vmatprep.subr.bf16.mxu0 0
  %2291 = vmatpush1.bf16.msra.mxu0 0
  %2292 = vmatprep.subr.bf16.mxu0 0
  %2293 = vmatpush1.bf16.msra.mxu0 0
  %2294 = vmatprep.subr.bf16.mxu0 0
  %2295 = vmatpush1.bf16.msra.mxu0 0
  %2296 = vmatprep.subr.bf16.mxu0 0
  %2297 = vmatpush1.bf16.msra.mxu0 0
  %2298 = vmatprep.subr.bf16.mxu0 0
  %2299 = vmatpush1.bf16.msra.mxu0 %v2282
  %2300 = vmatprep.subr.bf16.mxu0 0
  %2301 = vmatpush1.bf16.msra.mxu0 %v2281
  %2302 = vmatprep.subr.bf16.mxu0 0
  %2303 = vmatpush1.bf16.msra.mxu0 %v2280
  %2304 = vmatprep.subr.bf16.mxu0 0
  %2305 = vmatpush1.bf16.msra.mxu0 %v2279
  %2306 = vmatprep.subr.bf16.mxu0 0
  %2307 = vmatpush2.bf16.msra.mxu0 0
  %2308 = vmatprep.subr.bf16.mxu0 0
  %2309 = vmatpush2.bf16.msra.mxu0 0
  %2310 = vmatprep.subr.bf16.mxu0 0
  %2311 = vmatpush2.bf16.msra.mxu0 0
  %2312 = vmatprep.subr.bf16.mxu0 0
  %2313 = vmatpush2.bf16.msra.mxu0 0
  %2314 = vmatprep.subr.bf16.mxu0 0
  %2315 = vmatpush2.bf16.msra.mxu0 0
  %2316 = vmatprep.subr.bf16.mxu0 0
  %2317 = vmatpush2.bf16.msra.mxu0 0
  %2318 = vmatprep.subr.bf16.mxu0 0
  %2319 = vmatpush2.bf16.msra.mxu0 0
  %2320 = vmatprep.subr.bf16.mxu0 0
  %2321 = vmatpush2.bf16.msra.mxu0 0
  %2322 = vmatprep.mubr.bf16.mxu0 0
  %2323 = vmatmul.mubr.bf16.gmra.mxu0 %v2288
  %v2324 = vpop.f32.mrf.mxu0
  %v2325 = vadd.f32 %v2262, %v2324
  %v2326 = vpop.f32.mrf.mxu0
  %v2327 = vpop.f32.mrf.mxu0
  %v2328 = vpop.f32.mrf.mxu0
  %2329 = vdwg.mxu0
  %vm2330 = vcmp.gt.f32.partialorder %v2325, 0.0
  %v2331 = vmul.f32 %v2325, 1.442695
  %v2332 = vpow.pop %v2331
  %v2333 = vsub.f32 %v2332, 1.0
  %v2334 = vsel %vm2330, %v2325, %v2333
  %v2335 = vld [vmem:[%s17] sm:$0xf]
  %v2336 = vld [vmem:[%s17 + $0x4] sm:$0xf]
  %v2337 = vld [vmem:[%s17 + $0x8] sm:$0xf]
  %v2338 = vld [vmem:[%s17 + $0xc] sm:$0xf]
  %v2339 = vld [vmem:[%s17 + $0x10] sm:$0xf]
  %v2340 = vld [vmem:[%s17 + $0x14] sm:$0xf]
  %v2341 = vld [vmem:[%s17 + $0x18] sm:$0xf]
  %v2342 = vld [vmem:[%s17 + $0x1c] sm:$0xf]
  %v2343 = vpack.c.bf16 %v2334, %v2334
  %v2344 = vld [vmem:[%s18] sm:$0x1]
  %v2353 = vunpack.c.l.b16 %v2335
  %v2354 = vunpack.c.l.b16 %v2336
  %v2355 = vunpack.c.l.b16 %v2337
  %v2356 = vunpack.c.l.b16 %v2338
  %v2357 = vunpack.c.l.b16 %v2339
  %v2358 = vunpack.c.l.b16 %v2340
  %v2359 = vunpack.c.l.b16 %v2341
  %v2360 = vunpack.c.l.b16 %v2342
  %v2361 = vpack.c.b16 %v2354, %v2353
  %v2362 = vpack.c.b16 %v2356, %v2355
  %v2363 = vpack.c.b16 %v2358, %v2357
  %v2364 = vpack.c.b16 %v2360, %v2359
  %v2370 = vsel %vm245, %v2343, 0
  %2372 = vmatprep.subr.bf16.mxu0 0
  %2373 = vmatpush1.bf16.msra.mxu0 0
  %2374 = vmatprep.subr.bf16.mxu0 0
  %2375 = vmatpush1.bf16.msra.mxu0 0
  %2376 = vmatprep.subr.bf16.mxu0 0
  %2377 = vmatpush1.bf16.msra.mxu0 0
  %2378 = vmatprep.subr.bf16.mxu0 0
  %2379 = vmatpush1.bf16.msra.mxu0 0
  %2380 = vmatprep.subr.bf16.mxu0 0
  %2381 = vmatpush1.bf16.msra.mxu0 %v2364
  %2382 = vmatprep.subr.bf16.mxu0 0
  %2383 = vmatpush1.bf16.msra.mxu0 %v2363
  %2384 = vmatprep.subr.bf16.mxu0 0
  %2385 = vmatpush1.bf16.msra.mxu0 %v2362
  %2386 = vmatprep.subr.bf16.mxu0 0
  %2387 = vmatpush1.bf16.msra.mxu0 %v2361
  %2388 = vmatprep.subr.bf16.mxu0 0
  %2389 = vmatpush2.bf16.msra.mxu0 0
  %2390 = vmatprep.subr.bf16.mxu0 0
  %2391 = vmatpush2.bf16.msra.mxu0 0
  %2392 = vmatprep.subr.bf16.mxu0 0
  %2393 = vmatpush2.bf16.msra.mxu0 0
  %2394 = vmatprep.subr.bf16.mxu0 0
  %2395 = vmatpush2.bf16.msra.mxu0 0
  %2396 = vmatprep.subr.bf16.mxu0 0
  %2397 = vmatpush2.bf16.msra.mxu0 0
  %2398 = vmatprep.subr.bf16.mxu0 0
  %2399 = vmatpush2.bf16.msra.mxu0 0
  %2400 = vmatprep.subr.bf16.mxu0 0
  %2401 = vmatpush2.bf16.msra.mxu0 0
  %2402 = vmatprep.subr.bf16.mxu0 0
  %2403 = vmatpush2.bf16.msra.mxu0 0
  %2404 = vmatprep.mubr.bf16.mxu0 0
  %2405 = vmatmul.mubr.bf16.gmra.mxu0 %v2370
  %v2406 = vpop.f32.mrf.mxu0
  %v2407 = vadd.f32 %v2344, %v2406
  %v2408 = vpop.f32.mrf.mxu0
  %v2409 = vpop.f32.mrf.mxu0
  %v2410 = vpop.f32.mrf.mxu0
  %2411 = vdwg.mxu0
  %2412 = vst [vmem:[%s19] sm:$0x1] %v2407
  // Predicated region
  $region78: #{cnn_critic_forward.1} parent=0 // pred_check
    _
  $region79: #{cnn_critic_forward.1} parent=0 // pred_check_branch
    %2414 = sbr.rel (0) target = $region81
  $region80: #{cnn_critic_forward.1} parent=0 // pred_region
    _
  $region81: #{cnn_critic_forward.1} parent=0 // pred_fallthru
    _
  // Predicated region
  $region82: #{cnn_critic_forward.1} parent=0 // pred_check
    _
  $region83: #{cnn_critic_forward.1} parent=0 // pred_check_branch
    %2416 = sbr.rel (0) target = $region85
  $region84: #{cnn_critic_forward.1} parent=0 // pred_region
    _
  $region85: #{cnn_critic_forward.1} parent=0 // pred_fallthru
    _

</llo_original>
